<compile_context>
chip_gen: v6e
topology: v6e:2x2x1
jax: 0.10.0
libtpu: 0.0.40
codegen_flags: <defaults>
</compile_context>

<pallas_src>
import math

import jax
import jax.numpy as jnp
from jax import lax
from jax.experimental import pallas as pl
from jax.experimental.pallas import tpu as pltpu


# ------------------------------- tiling helpers -------------------------------
def _round_up(v, m):
    return ((v + m - 1) // m) * m


def _tile_bytes(shape, itemsize=4):
    """VMEM footprint of a tile after (8, 128) layout padding of the last two dims."""
    s = list(shape)
    if len(s) == 1:
        s = [1] + s
    s[-1] = _round_up(s[-1], 128)
    s[-2] = _round_up(s[-2], 8)
    n = 1
    for d in s:
        n *= d
    return n * itemsize


def _vmem_budget_bytes():
    """Generation-aware budget: 75% of physical VMEM (v5e/v6e 128 MiB, v7x 64 MiB/TC)."""
    cap = None
    try:
        cap = getattr(pltpu.get_tpu_info(), "vmem_capacity_bytes", None)
    except Exception:
        cap = None
    if not cap:
        cap = 64 * 1024 * 1024            # conservative fallback == v7x per-TensorCore
    return int(cap) * 3 // 4


def _vmem_estimate(th, W, cin, cinit, cnew):
    cout = cinit + cnew
    # blocks managed by the Pallas pipeline (double-buffered)
    x_mid = _tile_bytes((th, W, cin))
    halos = 2 * _tile_bytes((1, W, cin))
    out = _tile_bytes((th, W, cout))
    weights = (_tile_bytes((cin, cinit)) + _tile_bytes((1, cinit))
               + _tile_bytes((3, 3, cnew)) + _tile_bytes((1, cnew)))
    # in-kernel working set (vregs; the compiler spills to VMEM for large tiles)
    values = (_tile_bytes(((th + 2) * W, cin))        # stacked conv1x1 input
              + _tile_bytes(((th + 2) * W, cinit))    # conv1x1 result
              + _tile_bytes((th + 2, W + 2, cinit))   # zero-padded x1 stencil source
              + _tile_bytes((th, W, cnew)))           # depthwise accumulator
    return 2 * (x_mid + halos + out + weights) + values


def _pick_tile_h(N, H, W, cin, cinit, cnew, max_tile_h, budget):
    cap = max(1, min(max_tile_h, H))
    if N == 1 and H >= 2:
        # only force >= 2 row tiles when the batch axis gives no grid steps to pipeline
        cap = min(cap, max(H // 2, 1))
    th = 1
    for t in range(1, cap + 1):
        if _vmem_estimate(t, W, cin, cinit, cnew) <= budget:
            th = t
    # no "H % th == 0" requirement: even out the ragged last tile at equal step count
    steps = -(-H // th)
    return -(-H // steps)


# ------------------------------- fused kernel ---------------------------------
def _ghost_fused(x_nhwc, w1s, b1, wdws, b2, *, tile_h, vmem_limit):
    N, H, W, Cin = x_nhwc.shape
    Cinit = w1s.shape[1]
    Cnew = wdws.shape[2]
    Cout = Cinit + Cnew
    assert Cnew == Cinit, "kernel assumes ratio=2 (new_channels == init_channels)"
    TH = int(tile_h)
    R = -(-H // TH)                       # cdiv: last tile may be ragged
    nb_valid = H - (R - 1) * TH           # valid rows in the last tile (static, >= 1)
    f32 = jnp.float32

    def kernel(x_mid_ref, x_top_ref, x_bot_ref, w1_ref, b1_ref, wdw_ref, b2_ref, o_ref):
        top = pl.program_id(1) * TH
        last_tile = top + TH >= H         # only the last tile can touch the bottom edge

        # ---- primary_conv: ONE fused MXU matmul over the TH rows + both 1-row halos ----
        x_all = jnp.concatenate(
            [x_top_ref[...].reshape(1, W, Cin),
             x_mid_ref[...],
             x_bot_ref[...].reshape(1, W, Cin)],
            axis=0).reshape((TH + 2) * W, Cin)
        # matmul runs in the input dtype (bf16 x / w1s => full-rate MXU on v6e/v7x);
        # BN scale is pre-folded into w1s, so only bias + ReLU remain.
        y = jnp.dot(x_all, w1_ref[...], preferred_element_type=f32)
        y = jnp.maximum(y + b1_ref[...].astype(f32), 0.0).reshape(TH + 2, W, Cinit)

        # Rows outside the image (SAME padding at the borders and the ragged last
        # tile's out-of-bounds rows) must contribute zero to the depthwise conv.
        # jnp.where (not multiply) so stale/NaN data in padded blocks cannot leak.
        x1_top = jnp.where(top > 0, y[0:1], 0.0)
        x1_bot = jnp.where(last_tile, 0.0, y[TH + 1:TH + 2])
        if nb_valid < TH:                 # static branch: only emitted for ragged H
            x1_mid = jnp.concatenate(
                [y[1:nb_valid + 1],
                 jnp.where(last_tile, 0.0, y[nb_valid + 1:TH + 1])], axis=0)
        else:
            x1_mid = y[1:TH + 1]

        # ---- fused concat, half 1: x1 goes straight to its channel slice ----
        o_ref[:, :, :Cinit] = x1_mid.astype(o_ref.dtype)

        # ---- cheap_operation: 3x3 depthwise over a register-resident, zero-padded x1 ----
        x1_all = jnp.concatenate([x1_top, x1_mid, x1_bot], axis=0)     # (TH+2, W, Cinit)
        zc = jnp.zeros((TH + 2, 1, Cinit), f32)
        x1p = jnp.concatenate([zc, x1_all, zc], axis=1)                # (TH+2, W+2, Cinit)
        wdw = wdw_ref[...].astype(f32)                                 # (3, 3, Cnew)
        acc = jnp.zeros((TH, W, Cnew), f32)
        for dy in range(3):               # static, fully unrolled 9-tap stencil
            for dx in range(3):
                acc = acc + x1p[dy:dy + TH, dx:dx + W, :] * wdw[dy, dx]
        x2 = jnp.maximum(acc + b2_ref[...].astype(f32).reshape(1, 1, Cnew), 0.0)

        # ---- fused concat, half 2 ----
        o_ref[:, :, Cinit:] = x2.astype(o_ref.dtype)

    return pl.pallas_call(
        kernel,
        out_shape=jax.ShapeDtypeStruct((N, H, W, Cout), x_nhwc.dtype),
        grid=(N, R),
        in_specs=[
            # row tile of x (H need not divide evenly; OOB rows are masked in-kernel)
            pl.BlockSpec((None, TH, W, Cin), lambda n, r: (n, r, 0, 0)),
            # 1-row top/bottom halos (block size 1 along H => block index == row index),
            # clamped at the borders and zero-masked inside the kernel
            pl.BlockSpec((None, None, W, Cin),
                         lambda n, r: (n, jnp.maximum(r * TH - 1, 0), 0, 0)),
            pl.BlockSpec((None, None, W, Cin),
                         lambda n, r: (n, jnp.minimum(r * TH + TH, H - 1), 0, 0)),
            pl.BlockSpec((Cin, Cinit), lambda n, r: (0, 0)),
            pl.BlockSpec((1, Cinit), lambda n, r: (0, 0)),
            pl.BlockSpec((3, 3, Cnew), lambda n, r: (0, 0, 0)),
            pl.BlockSpec((1, Cnew), lambda n, r: (0, 0)),
        ],
        out_specs=pl.BlockSpec((None, TH, W, Cout), lambda n, r: (n, r, 0, 0)),
        compiler_params=pltpu.CompilerParams(
            dimension_semantics=("parallel", "parallel"),
            vmem_limit_bytes=int(vmem_limit)),
    )(x_nhwc, x_nhwc, x_nhwc, w1s, b1, wdws, b2)


# -------------------- GhostModule wrapper (NCHW in / NCHW out) -----------------
def ghost_module_forward(x_nchw, params, *, max_tile_h=64):
    N, Cin, H, W = x_nchw.shape
    w1s, b1 = params["w1s"], params["b1"]
    wdws, b2 = params["wdws"], params["b2"]
    Cinit, Cnew = w1s.shape[1], wdws.shape[2]

    budget = _vmem_budget_bytes()
    tile_h = _pick_tile_h(N, H, W, Cin, Cinit, Cnew, max_tile_h, budget)
    est = _vmem_estimate(tile_h, W, Cin, Cinit, Cnew)
    # est already includes pipeline double-buffering: ~1.3x headroom, capped at budget.
    vmem_limit = int(min(budget, max(est * 1.3, 32 * 1024 * 1024)))
    vmem_limit = max(vmem_limit, int(est * 1.05))

    x_nhwc = jnp.transpose(x_nchw, (0, 2, 3, 1))
    out_nhwc = _ghost_fused(x_nhwc, w1s, b1, wdws, b2,
                            tile_h=tile_h, vmem_limit=vmem_limit)
    return jnp.transpose(out_nhwc, (0, 3, 1, 2))


# --------- deterministic synthetic parameters (GhostModule.__init__ shapes) ----
def make_params(key, inp, oup, kernel_size=1, ratio=2, dw_size=3):
    assert kernel_size == 1 and ratio == 2 and dw_size == 3
    init_channels = math.ceil(oup / ratio)
    new_channels = init_channels * (ratio - 1)
    eps = 1e-5
    ks = jax.random.split(key, 10)

    # primary_conv: Conv2d(inp, init_channels, 1, bias=False) -> (Cinit, Cin, 1, 1)
    w1_oihw = 0.2 * jax.random.normal(ks[0], (init_channels, inp, 1, 1), jnp.float32)
    g1 = 1.0 + 0.1 * jax.random.normal(ks[1], (init_channels,), jnp.float32)
    b1 = 0.1 * jax.random.normal(ks[2], (init_channels,), jnp.float32)
    m1 = 0.1 * jax.random.normal(ks[3], (init_channels,), jnp.float32)
    v1 = jnp.abs(jax.random.normal(ks[4], (init_channels,), jnp.float32)) + 0.5

    # cheap_operation: Conv2d(init, new, 3, groups=init, bias=False) -> (Cnew, 1, 3, 3)
    wdw_oihw = 0.2 * jax.random.normal(ks[5], (new_channels, 1, 3, 3), jnp.float32)
    g2 = 1.0 + 0.1 * jax.random.normal(ks[6], (new_channels,), jnp.float32)
    b2 = 0.1 * jax.random.normal(ks[7], (new_channels,), jnp.float32)
    m2 = 0.1 * jax.random.normal(ks[8], (new_channels,), jnp.float32)
    v2 = jnp.abs(jax.random.normal(ks[9], (new_channels,), jnp.float32)) + 0.5

    scale1 = g1 / jnp.sqrt(v1 + eps)
    bias1 = b1 - m1 * scale1
    scale2 = g2 / jnp.sqrt(v2 + eps)
    bias2 = b2 - m2 * scale2

    # BN scale folded directly into the conv weights (kernel only adds bias + ReLU).
    w1_kio = jnp.transpose(w1_oihw[:, :, 0, 0], (1, 0))          # (Cin, Cinit)
    wdw_hwc = jnp.transpose(wdw_oihw[:, 0, :, :], (1, 2, 0))     # (3, 3, Cnew)
    params = {
        "w1s": w1_kio * scale1[None, :],
        "b1": bias1[None, :],
        "wdws": wdw_hwc * scale2[None, None, :],
        "b2": bias2[None, :],
        # originals kept for the pure-JAX reference check
        "w1_oihw": w1_oihw, "wdw_oihw": wdw_oihw,
        "scale1": scale1, "bias1": bias1, "scale2": scale2, "bias2": bias2,
    }
    return params, init_channels, new_channels


def reference_forward(x_nchw, params, init_channels):
    # Pure-JAX reference (lax.conv) used only to validate the Pallas kernel.
    y = lax.conv_general_dilated(
        x_nchw, params["w1_oihw"], (1, 1), "VALID",
        dimension_numbers=("NCHW", "OIHW", "NCHW"))
    y = y * params["scale1"][None, :, None, None] + params["bias1"][None, :, None, None]
    x1 = jnp.maximum(y, 0.0)
    y2 = lax.conv_general_dilated(
        x1, params["wdw_oihw"], (1, 1), "SAME",
        dimension_numbers=("NCHW", "OIHW", "NCHW"),
        feature_group_count=init_channels)
    y2 = y2 * params["scale2"][None, :, None, None] + params["bias2"][None, :, None, None]
    x2 = jnp.maximum(y2, 0.0)
    return jnp.concatenate([x1, x2], axis=1)


if __name__ == "__main__":
    key = jax.random.PRNGKey(0)
    kx, kp, kx2 = jax.random.split(key, 3)

    N, inp, H, W = 2, 4, 16, 16
    oup = 8
    params, init_channels, new_channels = make_params(kp, inp, oup)

    # case 1: standard shape (single row tile per image, image-border halos)
    x = jax.random.normal(kx, (N, inp, H, W), jnp.float32)       # NCHW, like PyTorch
    out = jax.block_until_ready(ghost_module_forward(x, params))
    assert out.shape == (N, init_channels + new_channels, H, W), out.shape
    ref = reference_forward(x, params, init_channels)
    assert jnp.allclose(out, ref, rtol=1e-5, atol=1e-5), float(jnp.max(jnp.abs(out - ref)))

    # case 2: H not divisible by the row tile (exercises cross-tile halos and the
    # ragged-last-tile masking path)
    H2 = 13
    x_odd = jax.random.normal(kx2, (N, inp, H2, W), jnp.float32)
    out2 = jax.block_until_ready(ghost_module_forward(x_odd, params, max_tile_h=8))
    ref2 = reference_forward(x_odd, params, init_channels)
    assert out2.shape == ref2.shape, (out2.shape, ref2.shape)
    assert jnp.allclose(out2, ref2, rtol=1e-5, atol=1e-5), \
        float(jnp.max(jnp.abs(out2 - ref2)))

    print("KERNEL_OK")
</pallas_src>

<mosaic_0001>
module attributes {stable_mosaic.version = 11 : i64} {
  func.func @kernel(%arg0: i32, %arg1: i32, %arg2: memref<1x16x16x4xf32, #tpu.memory_space<vmem>>, %arg3: memref<1x1x16x4xf32, #tpu.memory_space<vmem>>, %arg4: memref<1x1x16x4xf32, #tpu.memory_space<vmem>>, %arg5: memref<4x4xf32, #tpu.memory_space<vmem>>, %arg6: memref<1x4xf32, #tpu.memory_space<vmem>>, %arg7: memref<3x3x4xf32, #tpu.memory_space<vmem>>, %arg8: memref<1x4xf32, #tpu.memory_space<vmem>>, %arg9: memref<1x16x16x8xf32, #tpu.memory_space<vmem>>) attributes {dimension_semantics = [#tpu.dimension_semantics<parallel>, #tpu.dimension_semantics<parallel>], iteration_bounds = array<i64: 2, 1>, scalar_prefetch = 0 : i64, scratch_operands = 0 : i64, tpu.core_type = #tpu.core_type<tc>, window_params = [{transform_indices = @transform_0, window_bounds = array<i64: 1, 16, 16, 4>}, {transform_indices = @transform_1, window_bounds = array<i64: 1, 1, 16, 4>}, {transform_indices = @transform_2, window_bounds = array<i64: 1, 1, 16, 4>}, {pipeline_mode = #tpu.pipeline_mode<synchronous>, transform_indices = @transform_3, window_bounds = array<i64: 4, 4>}, {pipeline_mode = #tpu.pipeline_mode<synchronous>, transform_indices = @transform_4, window_bounds = array<i64: 1, 4>}, {pipeline_mode = #tpu.pipeline_mode<synchronous>, transform_indices = @transform_5, window_bounds = array<i64: 3, 3, 4>}, {pipeline_mode = #tpu.pipeline_mode<synchronous>, transform_indices = @transform_6, window_bounds = array<i64: 1, 4>}, {transform_indices = @transform_7, window_bounds = array<i64: 1, 16, 16, 8>}]} {
    %c16_i32 = arith.constant 16 : i32
    %0 = arith.muli %arg1, %c16_i32 : i32
    %c16_i32_0 = arith.constant 16 : i32
    %1 = arith.addi %0, %c16_i32_0 : i32
    %c16_i32_1 = arith.constant 16 : i32
    %2 = arith.cmpi sge, %1, %c16_i32_1 : i32
    %c0 = arith.constant 0 : index
    %c0_2 = arith.constant 0 : index
    %c0_3 = arith.constant 0 : index
    %c0_4 = arith.constant 0 : index
    %3 = vector.load %arg3[%c0, %c0_2, %c0_3, %c0_4] : memref<1x1x16x4xf32, #tpu.memory_space<vmem>>, vector<1x1x16x4xf32>
    %4 = vector.shape_cast %3 : vector<1x1x16x4xf32> to vector<16x4xf32>
    %5 = vector.shape_cast %4 : vector<16x4xf32> to vector<1x16x4xf32>
    %c0_5 = arith.constant 0 : index
    %c0_6 = arith.constant 0 : index
    %c0_7 = arith.constant 0 : index
    %c0_8 = arith.constant 0 : index
    %6 = vector.load %arg2[%c0_5, %c0_6, %c0_7, %c0_8] : memref<1x16x16x4xf32, #tpu.memory_space<vmem>>, vector<1x16x16x4xf32>
    %7 = vector.shape_cast %6 : vector<1x16x16x4xf32> to vector<16x16x4xf32>
    %c0_9 = arith.constant 0 : index
    %c0_10 = arith.constant 0 : index
    %c0_11 = arith.constant 0 : index
    %c0_12 = arith.constant 0 : index
    %8 = vector.load %arg4[%c0_9, %c0_10, %c0_11, %c0_12] : memref<1x1x16x4xf32, #tpu.memory_space<vmem>>, vector<1x1x16x4xf32>
    %9 = vector.shape_cast %8 : vector<1x1x16x4xf32> to vector<16x4xf32>
    %10 = vector.shape_cast %9 : vector<16x4xf32> to vector<1x16x4xf32>
    %11 = tpu.concatenate %5, %7, %10 in 0 : vector<1x16x4xf32>, vector<16x16x4xf32>, vector<1x16x4xf32> -> vector<18x16x4xf32>
    %12 = vector.shape_cast %11 : vector<18x16x4xf32> to vector<288x4xf32>
    %c0_13 = arith.constant 0 : index
    %c0_14 = arith.constant 0 : index
    %13 = vector.load %arg5[%c0_13, %c0_14] : memref<4x4xf32, #tpu.memory_space<vmem>>, vector<4x4xf32>
    %cst = arith.constant dense<0.000000e+00> : vector<288x4xf32>
    %14 = tpu.matmul %12, %13, %cst {dimension_numbers = #tpu.dot_dimension_numbers<[1], [0], [0], [1], [0, 0, 1, 1], [], []>} : vector<288x4xf32>, vector<4x4xf32>, vector<288x4xf32> -> vector<288x4xf32>
    %c0_15 = arith.constant 0 : index
    %c0_16 = arith.constant 0 : index
    %15 = vector.load %arg6[%c0_15, %c0_16] : memref<1x4xf32, #tpu.memory_space<vmem>>, vector<1x4xf32>
    %16 = vector.broadcast %15 : vector<1x4xf32> to vector<288x4xf32>
    %17 = arith.addf %14, %16 : vector<288x4xf32>
    %cst_17 = arith.constant 0.000000e+00 : f32
    %18 = vector.broadcast %cst_17 : f32 to vector<288x4xf32>
    %19 = arith.maximumf %17, %18 : vector<288x4xf32>
    %20 = vector.shape_cast %19 : vector<288x4xf32> to vector<18x16x4xf32>
    %c0_i32 = arith.constant 0 : i32
    %21 = arith.cmpi sgt, %0, %c0_i32 : i32
    %22 = vector.extract_strided_slice %20 {offsets = [0, 0, 0], sizes = [1, 16, 4], strides = [1, 1, 1]} : vector<18x16x4xf32> to vector<1x16x4xf32>
    %cst_18 = arith.constant 0.000000e+00 : f32
    %23 = vector.broadcast %cst_18 : f32 to vector<1x16x4xf32>
    %24 = arith.select %21, %22, %23 : vector<1x16x4xf32>
    %25 = vector.extract_strided_slice %20 {offsets = [17, 0, 0], sizes = [1, 16, 4], strides = [1, 1, 1]} : vector<18x16x4xf32> to vector<1x16x4xf32>
    %cst_19 = arith.constant 0.000000e+00 : f32
    %26 = vector.broadcast %cst_19 : f32 to vector<1x16x4xf32>
    %27 = arith.select %2, %26, %25 : vector<1x16x4xf32>
    %28 = vector.extract_strided_slice %20 {offsets = [1, 0, 0], sizes = [16, 16, 4], strides = [1, 1, 1]} : vector<18x16x4xf32> to vector<16x16x4xf32>
    %c0_20 = arith.constant 0 : index
    %c0_21 = arith.constant 0 : index
    %c0_22 = arith.constant 0 : index
    %c0_23 = arith.constant 0 : index
    %29 = vector.load %arg9[%c0_20, %c0_21, %c0_22, %c0_23] : memref<1x16x16x8xf32, #tpu.memory_space<vmem>>, vector<1x16x16x4xf32>
    %30 = vector.shape_cast %29 : vector<1x16x16x4xf32> to vector<16x16x4xf32>
    %31 = vector.shape_cast %28 : vector<16x16x4xf32> to vector<1x16x16x4xf32>
    tpu.vector_store %arg9[%c0_20, %c0_21, %c0_22, %c0_23], %31 {strides = array<i32>} : memref<1x16x16x8xf32, #tpu.memory_space<vmem>>, vector<1x16x16x4xf32>,
    %32 = tpu.concatenate %24, %28, %27 in 0 : vector<1x16x4xf32>, vector<16x16x4xf32>, vector<1x16x4xf32> -> vector<18x16x4xf32>
    %cst_24 = arith.constant 0.000000e+00 : f32
    %33 = vector.broadcast %cst_24 : f32 to vector<18x1x4xf32>
    %34 = tpu.concatenate %33, %32, %33 in 1 : vector<18x1x4xf32>, vector<18x16x4xf32>, vector<18x1x4xf32> -> vector<18x18x4xf32>
    %c0_25 = arith.constant 0 : index
    %c0_26 = arith.constant 0 : index
    %c0_27 = arith.constant 0 : index
    %35 = vector.load %arg7[%c0_25, %c0_26, %c0_27] : memref<3x3x4xf32, #tpu.memory_space<vmem>>, vector<3x3x4xf32>
    %cst_28 = arith.constant 0.000000e+00 : f32
    %36 = vector.broadcast %cst_28 : f32 to vector<16x16x4xf32>
    %37 = vector.extract_strided_slice %34 {offsets = [0, 0, 0], sizes = [16, 16, 4], strides = [1, 1, 1]} : vector<18x18x4xf32> to vector<16x16x4xf32>
    %38 = vector.extract_strided_slice %35 {offsets = [0, 0, 0], sizes = [1, 1, 4], strides = [1, 1, 1]} : vector<3x3x4xf32> to vector<1x1x4xf32>
    %39 = vector.shape_cast %38 : vector<1x1x4xf32> to vector<4xf32>
    %40 = vector.shape_cast %39 : vector<4xf32> to vector<1x1x4xf32>
    %41 = vector.broadcast %40 : vector<1x1x4xf32> to vector<16x16x4xf32>
    %42 = arith.mulf %37, %41 : vector<16x16x4xf32>
    %43 = arith.addf %36, %42 : vector<16x16x4xf32>
    %44 = vector.extract_strided_slice %34 {offsets = [0, 1, 0], sizes = [16, 16, 4], strides = [1, 1, 1]} : vector<18x18x4xf32> to vector<16x16x4xf32>
    %45 = vector.extract_strided_slice %35 {offsets = [0, 1, 0], sizes = [1, 1, 4], strides = [1, 1, 1]} : vector<3x3x4xf32> to vector<1x1x4xf32>
    %46 = vector.shape_cast %45 : vector<1x1x4xf32> to vector<4xf32>
    %47 = vector.shape_cast %46 : vector<4xf32> to vector<1x1x4xf32>
    %48 = vector.broadcast %47 : vector<1x1x4xf32> to vector<16x16x4xf32>
    %49 = arith.mulf %44, %48 : vector<16x16x4xf32>
    %50 = arith.addf %43, %49 : vector<16x16x4xf32>
    %51 = vector.extract_strided_slice %34 {offsets = [0, 2, 0], sizes = [16, 16, 4], strides = [1, 1, 1]} : vector<18x18x4xf32> to vector<16x16x4xf32>
    %52 = vector.extract_strided_slice %35 {offsets = [0, 2, 0], sizes = [1, 1, 4], strides = [1, 1, 1]} : vector<3x3x4xf32> to vector<1x1x4xf32>
    %53 = vector.shape_cast %52 : vector<1x1x4xf32> to vector<4xf32>
    %54 = vector.shape_cast %53 : vector<4xf32> to vector<1x1x4xf32>
    %55 = vector.broadcast %54 : vector<1x1x4xf32> to vector<16x16x4xf32>
    %56 = arith.mulf %51, %55 : vector<16x16x4xf32>
    %57 = arith.addf %50, %56 : vector<16x16x4xf32>
    %58 = vector.extract_strided_slice %34 {offsets = [1, 0, 0], sizes = [16, 16, 4], strides = [1, 1, 1]} : vector<18x18x4xf32> to vector<16x16x4xf32>
    %59 = vector.extract_strided_slice %35 {offsets = [1, 0, 0], sizes = [1, 1, 4], strides = [1, 1, 1]} : vector<3x3x4xf32> to vector<1x1x4xf32>
    %60 = vector.shape_cast %59 : vector<1x1x4xf32> to vector<4xf32>
    %61 = vector.shape_cast %60 : vector<4xf32> to vector<1x1x4xf32>
    %62 = vector.broadcast %61 : vector<1x1x4xf32> to vector<16x16x4xf32>
    %63 = arith.mulf %58, %62 : vector<16x16x4xf32>
    %64 = arith.addf %57, %63 : vector<16x16x4xf32>
    %65 = vector.extract_strided_slice %34 {offsets = [1, 1, 0], sizes = [16, 16, 4], strides = [1, 1, 1]} : vector<18x18x4xf32> to vector<16x16x4xf32>
    %66 = vector.extract_strided_slice %35 {offsets = [1, 1, 0], sizes = [1, 1, 4], strides = [1, 1, 1]} : vector<3x3x4xf32> to vector<1x1x4xf32>
    %67 = vector.shape_cast %66 : vector<1x1x4xf32> to vector<4xf32>
    %68 = vector.shape_cast %67 : vector<4xf32> to vector<1x1x4xf32>
    %69 = vector.broadcast %68 : vector<1x1x4xf32> to vector<16x16x4xf32>
    %70 = arith.mulf %65, %69 : vector<16x16x4xf32>
    %71 = arith.addf %64, %70 : vector<16x16x4xf32>
    %72 = vector.extract_strided_slice %34 {offsets = [1, 2, 0], sizes = [16, 16, 4], strides = [1, 1, 1]} : vector<18x18x4xf32> to vector<16x16x4xf32>
    %73 = vector.extract_strided_slice %35 {offsets = [1, 2, 0], sizes = [1, 1, 4], strides = [1, 1, 1]} : vector<3x3x4xf32> to vector<1x1x4xf32>
    %74 = vector.shape_cast %73 : vector<1x1x4xf32> to vector<4xf32>
    %75 = vector.shape_cast %74 : vector<4xf32> to vector<1x1x4xf32>
    %76 = vector.broadcast %75 : vector<1x1x4xf32> to vector<16x16x4xf32>
    %77 = arith.mulf %72, %76 : vector<16x16x4xf32>
    %78 = arith.addf %71, %77 : vector<16x16x4xf32>
    %79 = vector.extract_strided_slice %34 {offsets = [2, 0, 0], sizes = [16, 16, 4], strides = [1, 1, 1]} : vector<18x18x4xf32> to vector<16x16x4xf32>
    %80 = vector.extract_strided_slice %35 {offsets = [2, 0, 0], sizes = [1, 1, 4], strides = [1, 1, 1]} : vector<3x3x4xf32> to vector<1x1x4xf32>
    %81 = vector.shape_cast %80 : vector<1x1x4xf32> to vector<4xf32>
    %82 = vector.shape_cast %81 : vector<4xf32> to vector<1x1x4xf32>
    %83 = vector.broadcast %82 : vector<1x1x4xf32> to vector<16x16x4xf32>
    %84 = arith.mulf %79, %83 : vector<16x16x4xf32>
    %85 = arith.addf %78, %84 : vector<16x16x4xf32>
    %86 = vector.extract_strided_slice %34 {offsets = [2, 1, 0], sizes = [16, 16, 4], strides = [1, 1, 1]} : vector<18x18x4xf32> to vector<16x16x4xf32>
    %87 = vector.extract_strided_slice %35 {offsets = [2, 1, 0], sizes = [1, 1, 4], strides = [1, 1, 1]} : vector<3x3x4xf32> to vector<1x1x4xf32>
    %88 = vector.shape_cast %87 : vector<1x1x4xf32> to vector<4xf32>
    %89 = vector.shape_cast %88 : vector<4xf32> to vector<1x1x4xf32>
    %90 = vector.broadcast %89 : vector<1x1x4xf32> to vector<16x16x4xf32>
    %91 = arith.mulf %86, %90 : vector<16x16x4xf32>
    %92 = arith.addf %85, %91 : vector<16x16x4xf32>
    %93 = vector.extract_strided_slice %34 {offsets = [2, 2, 0], sizes = [16, 16, 4], strides = [1, 1, 1]} : vector<18x18x4xf32> to vector<16x16x4xf32>
    %94 = vector.extract_strided_slice %35 {offsets = [2, 2, 0], sizes = [1, 1, 4], strides = [1, 1, 1]} : vector<3x3x4xf32> to vector<1x1x4xf32>
    %95 = vector.shape_cast %94 : vector<1x1x4xf32> to vector<4xf32>
    %96 = vector.shape_cast %95 : vector<4xf32> to vector<1x1x4xf32>
    %97 = vector.broadcast %96 : vector<1x1x4xf32> to vector<16x16x4xf32>
    %98 = arith.mulf %93, %97 : vector<16x16x4xf32>
    %99 = arith.addf %92, %98 : vector<16x16x4xf32>
    %c0_29 = arith.constant 0 : index
    %c0_30 = arith.constant 0 : index
    %100 = vector.load %arg8[%c0_29, %c0_30] : memref<1x4xf32, #tpu.memory_space<vmem>>, vector<1x4xf32>
    %101 = vector.shape_cast %100 : vector<1x4xf32> to vector<1x1x4xf32>
    %102 = vector.broadcast %101 : vector<1x1x4xf32> to vector<16x16x4xf32>
    %103 = arith.addf %99, %102 : vector<16x16x4xf32>
    %cst_31 = arith.constant 0.000000e+00 : f32
    %104 = vector.broadcast %cst_31 : f32 to vector<16x16x4xf32>
    %105 = arith.maximumf %103, %104 : vector<16x16x4xf32>
    %c0_32 = arith.constant 0 : index
    %c0_33 = arith.constant 0 : index
    %c0_34 = arith.constant 0 : index
    %c4 = arith.constant 4 : index
    %106 = vector.load %arg9[%c0_32, %c0_33, %c0_34, %c4] : memref<1x16x16x8xf32, #tpu.memory_space<vmem>>, vector<1x16x16x4xf32>
    %107 = vector.shape_cast %106 : vector<1x16x16x4xf32> to vector<16x16x4xf32>
    %108 = vector.shape_cast %105 : vector<16x16x4xf32> to vector<1x16x16x4xf32>
    tpu.vector_store %arg9[%c0_32, %c0_33, %c0_34, %c4], %108 {strides = array<i32>} : memref<1x16x16x8xf32, #tpu.memory_space<vmem>>, vector<1x16x16x4xf32>,
    return
  }
  func.func @transform_0(%arg0: i32, %arg1: i32) -> (i32, i32, i32, i32) {
    %c0_i32 = arith.constant 0 : i32
    %c0_i32_0 = arith.constant 0 : i32
    %c0_i32_1 = arith.constant 0 : i32
    return %arg0, %arg1, %c0_i32, %c0_i32_0 : i32, i32, i32, i32
  }
  func.func @transform_1(%arg0: i32, %arg1: i32) -> (i32, i32, i32, i32) {
    %c16_i32 = arith.constant 16 : i32
    %0 = arith.muli %arg1, %c16_i32 : i32
    %c1_i32 = arith.constant 1 : i32
    %1 = arith.subi %0, %c1_i32 : i32
    %c0_i32 = arith.constant 0 : i32
    %2 = arith.maxsi %1, %c0_i32 : i32
    %c0_i32_0 = arith.constant 0 : i32
    %c0_i32_1 = arith.constant 0 : i32
    %c0_i32_2 = arith.constant 0 : i32
    return %arg0, %2, %c0_i32_0, %c0_i32_1 : i32, i32, i32, i32
  }
  func.func @transform_2(%arg0: i32, %arg1: i32) -> (i32, i32, i32, i32) {
    %c16_i32 = arith.constant 16 : i32
    %0 = arith.muli %arg1, %c16_i32 : i32
    %c16_i32_0 = arith.constant 16 : i32
    %1 = arith.addi %0, %c16_i32_0 : i32
    %c15_i32 = arith.constant 15 : i32
    %2 = arith.minsi %1, %c15_i32 : i32
    %c0_i32 = arith.constant 0 : i32
    %c0_i32_1 = arith.constant 0 : i32
    %c0_i32_2 = arith.constant 0 : i32
    return %arg0, %2, %c0_i32, %c0_i32_1 : i32, i32, i32, i32
  }
  func.func @transform_3(%arg0: i32, %arg1: i32) -> (i32, i32) {
    %c0_i32 = arith.constant 0 : i32
    %c0_i32_0 = arith.constant 0 : i32
    %c0_i32_1 = arith.constant 0 : i32
    return %c0_i32, %c0_i32_0 : i32, i32
  }
  func.func @transform_4(%arg0: i32, %arg1: i32) -> (i32, i32) {
    %c0_i32 = arith.constant 0 : i32
    %c0_i32_0 = arith.constant 0 : i32
    %c0_i32_1 = arith.constant 0 : i32
    return %c0_i32, %c0_i32_0 : i32, i32
  }
  func.func @transform_5(%arg0: i32, %arg1: i32) -> (i32, i32, i32) {
    %c0_i32 = arith.constant 0 : i32
    %c0_i32_0 = arith.constant 0 : i32
    %c0_i32_1 = arith.constant 0 : i32
    %c0_i32_2 = arith.constant 0 : i32
    return %c0_i32, %c0_i32_0, %c0_i32_1 : i32, i32, i32
  }
  func.func @transform_6(%arg0: i32, %arg1: i32) -> (i32, i32) {
    %c0_i32 = arith.constant 0 : i32
    %c0_i32_0 = arith.constant 0 : i32
    %c0_i32_1 = arith.constant 0 : i32
    return %c0_i32, %c0_i32_0 : i32, i32
  }
  func.func @transform_7(%arg0: i32, %arg1: i32) -> (i32, i32, i32, i32) {
    %c0_i32 = arith.constant 0 : i32
    %c0_i32_0 = arith.constant 0 : i32
    %c0_i32_1 = arith.constant 0 : i32
    return %arg0, %arg1, %c0_i32, %c0_i32_0 : i32, i32, i32, i32
  }
}

</mosaic_0001>

<llo_original>
// kernel: tpu_custom_call.1
$region0: #{tpu_custom_call.1}
  #allocation0 [shape = 'u32[]', space=smem, size = 0x4, offset = 0x4, fixed_abs, tag = 'smem constant byte address 0x4 - core index']
  #allocation1 [shape = 'u32[144,128]{1,0:T(1,128)}', space=vmem, size = 0x12000, scoped, tag = 'internal scratch']
  %s0 = inlined_call_operand.vmem [shape: f32[2,16,16,4], index: 0, kind: input, shape index: {}]
  %s1 = inlined_call_operand.vmem [shape: f32[2,16,16,4], index: 1, kind: input, shape index: {}]
  %s2 = inlined_call_operand.vmem [shape: f32[2,16,16,4], index: 2, kind: input, shape index: {}]
  %s3 = inlined_call_operand.vmem [shape: f32[4,4], index: 3, kind: input, shape index: {}]
  %s4 = inlined_call_operand.vmem [shape: f32[1,4], index: 4, kind: input, shape index: {}]
  %s5 = inlined_call_operand.vmem [shape: f32[3,3,4], index: 5, kind: input, shape index: {}]
  %s6 = inlined_call_operand.vmem [shape: f32[1,4], index: 6, kind: input, shape index: {}]
  %s7 = inlined_call_operand.vmem [shape: f32[2,16,16,8], index: 7, kind: output, shape index: {}]
  %s8 = sld [smem:[#allocation0]]
  $region61: #{tpu_custom_call.1} parent=0
    _
  %s10 = ssub.s32 1, %s8
  %s11 = scalar_select 0, %s10, %s8
  loop: start=0, step=1, limit=4
  $region2: #{tpu_custom_call.1} parent=0 // loop_pre_header
    _
  $region3: #{tpu_custom_call.1} parent=0 // loop_header
    %s13 = sphi 0, %s17
    %p14 = scmp.ge.s32.totalorder %s13, 4
    %s20 = sphi 0, %s32
    %s21 = sphi 0, %s28
    %s22 = sphi 0, %s20
    %s23 = sphi 0, %s21
    %s24 = sphi 0, %s22
    %s25 = sphi 0, %s23
    %s37 = sphi 0, %s39
    %s40 = sphi 0, %s37
    %s41 = sphi 0, %s40
    %s57 = sphi 0, %s41
    %s73 = sphi 0, %s75
    %s76 = sphi 0, %s73
    %s77 = sphi 0, %s76
    %s93 = sphi 0, %s77
    %s109 = sphi 0, %s111
    %s112 = sphi 0, %s109
    %s113 = sphi 0, %s112
    %s129 = sphi 0, %s113
    %s133 = sphi 0, %s133
    %s135 = sphi 0, %s133
    %s136 = sphi 0, %s135
    %s150 = sphi 0, %s136
    %s154 = sphi 0, %s154
    %s156 = sphi 0, %s154
    %s157 = sphi 0, %s156
    %s171 = sphi 0, %s157
    %s175 = sphi 0, %s175
    %s177 = sphi 0, %s175
    %s178 = sphi 0, %s177
    %s192 = sphi 0, %s178
    %s196 = sphi 0, %s196
    %s198 = sphi 0, %s196
    %s199 = sphi 0, %s198
    %s213 = sphi 0, %s199
    %s221 = sphi 0, %s223
    %s224 = sphi 0, %s221
    %s225 = sphi 0, %s224
    %s241 = sphi 0, %s225
  $region4: #{tpu_custom_call.1} parent=0 // loop_header_branch
    %16 = sbr.rel (%p14) target = $region8
  $region5: #{tpu_custom_call.1} parent=0 // loop_body
    %s18 = ssub.s32 %s13, 1
    %s19 = ssub.s32 %s13, 2
    %s26 = sadd.s32 1, %s21
    %p27 = scmp.ge.s32.totalorder %s26, 1
    %s28 = scalar_select %p27, 0, %s26
    %s29 = sadd.s32 1, %s20
    %s30 = scalar_select %p27, %s29, %s20
    %p31 = scmp.ge.s32.totalorder %s30, 2
    %s32 = scalar_select %p31, 0, %s30
    %s33 = ssub.s32 %s20, %s32
    %s34 = ssub.s32 %s21, %s28
    %s35 = sor.u32 %s33, %s34
    %p36 = scmp.eq.s32.totalorder %s35, 0
    %s38 = sadd.s32 %s37, 1
    %s39 = scalar_select %p36, %s37, %s38
    %p42 = pneg %p36
    %p43 = scmp.eq.s32.totalorder %s13, 1
    %p44 = por %p42, %p43
    %p45 = scmp.ne.s32.totalorder %s37, %s40
    %p46 = scmp.eq.s32.totalorder %s13, 0
    %p47 = por %p45, %p46
    %p48 = scmp.ne.s32.totalorder %s37, %s40
    %p49 = scmp.eq.s32.totalorder %s18, 1
    %p50 = por %p48, %p49
    %p51 = scmp.ne.s32.totalorder %s40, %s41
    %p52 = scmp.eq.s32.totalorder %s18, 0
    %p53 = por %p51, %p52
    %p54 = scmp.ne.s32.totalorder %s40, %s41
    %p55 = scmp.eq.s32.totalorder %s19, 1
    %p56 = por %p54, %p55
    %p58 = scmp.ne.s32.totalorder %s41, %s57
    %p59 = scmp.eq.s32.totalorder %s19, 0
    %p60 = por %p58, %p59
    %s61 = smul.u32 %s21, 16
    %s62 = ssub.s32 %s61, 1
    %p63 = scmp.gt.s32.totalorder %s62, 0
    %s64 = scalar_select %p63, %s62, 0
    %s65 = smul.u32 %s28, 16
    %s66 = ssub.s32 %s65, 1
    %p67 = scmp.gt.s32.totalorder %s66, 0
    %s68 = scalar_select %p67, %s66, 0
    %s69 = ssub.s32 %s20, %s32
    %s70 = ssub.s32 %s64, %s68
    %s71 = sor.u32 %s69, %s70
    %p72 = scmp.eq.s32.totalorder %s71, 0
    %s74 = sadd.s32 %s73, 1
    %s75 = scalar_select %p72, %s73, %s74
    %p78 = pneg %p72
    %p79 = scmp.eq.s32.totalorder %s13, 1
    %p80 = por %p78, %p79
    %p81 = scmp.ne.s32.totalorder %s73, %s76
    %p82 = scmp.eq.s32.totalorder %s13, 0
    %p83 = por %p81, %p82
    %p84 = scmp.ne.s32.totalorder %s73, %s76
    %p85 = scmp.eq.s32.totalorder %s18, 1
    %p86 = por %p84, %p85
    %p87 = scmp.ne.s32.totalorder %s76, %s77
    %p88 = scmp.eq.s32.totalorder %s18, 0
    %p89 = por %p87, %p88
    %p90 = scmp.ne.s32.totalorder %s76, %s77
    %p91 = scmp.eq.s32.totalorder %s19, 1
    %p92 = por %p90, %p91
    %p94 = scmp.ne.s32.totalorder %s77, %s93
    %p95 = scmp.eq.s32.totalorder %s19, 0
    %p96 = por %p94, %p95
    %s97 = smul.u32 %s21, 16
    %s98 = sadd.s32 %s97, 16
    %p99 = scmp.lt.s32.totalorder %s98, 15
    %s100 = scalar_select %p99, %s98, 15
    %s101 = smul.u32 %s28, 16
    %s102 = sadd.s32 %s101, 16
    %p103 = scmp.lt.s32.totalorder %s102, 15
    %s104 = scalar_select %p103, %s102, 15
    %s105 = ssub.s32 %s20, %s32
    %s106 = ssub.s32 %s100, %s104
    %s107 = sor.u32 %s105, %s106
    %p108 = scmp.eq.s32.totalorder %s107, 0
    %s110 = sadd.s32 %s109, 1
    %s111 = scalar_select %p108, %s109, %s110
    %p114 = pneg %p108
    %p115 = scmp.eq.s32.totalorder %s13, 1
    %p116 = por %p114, %p115
    %p117 = scmp.ne.s32.totalorder %s109, %s112
    %p118 = scmp.eq.s32.totalorder %s13, 0
    %p119 = por %p117, %p118
    %p120 = scmp.ne.s32.totalorder %s109, %s112
    %p121 = scmp.eq.s32.totalorder %s18, 1
    %p122 = por %p120, %p121
    %p123 = scmp.ne.s32.totalorder %s112, %s113
    %p124 = scmp.eq.s32.totalorder %s18, 0
    %p125 = por %p123, %p124
    %p126 = scmp.ne.s32.totalorder %s112, %s113
    %p127 = scmp.eq.s32.totalorder %s19, 1
    %p128 = por %p126, %p127
    %p130 = scmp.ne.s32.totalorder %s113, %s129
    %p131 = scmp.eq.s32.totalorder %s19, 0
    %p132 = por %p130, %p131
    %s134 = sadd.s32 %s133, 1
    %p137 = scmp.eq.s32.totalorder %s13, 1
    %p138 = scmp.ne.s32.totalorder %s133, %s135
    %p139 = scmp.eq.s32.totalorder %s13, 0
    %p140 = por %p138, %p139
    %p141 = scmp.ne.s32.totalorder %s133, %s135
    %p142 = scmp.eq.s32.totalorder %s18, 1
    %p143 = por %p141, %p142
    %p144 = scmp.ne.s32.totalorder %s135, %s136
    %p145 = scmp.eq.s32.totalorder %s18, 0
    %p146 = por %p144, %p145
    %p147 = scmp.ne.s32.totalorder %s135, %s136
    %p148 = scmp.eq.s32.totalorder %s19, 1
    %p149 = por %p147, %p148
    %p151 = scmp.ne.s32.totalorder %s136, %s150
    %p152 = scmp.eq.s32.totalorder %s19, 0
    %p153 = por %p151, %p152
    %s155 = sadd.s32 %s154, 1
    %p158 = scmp.eq.s32.totalorder %s13, 1
    %p159 = scmp.ne.s32.totalorder %s154, %s156
    %p160 = scmp.eq.s32.totalorder %s13, 0
    %p161 = por %p159, %p160
    %p162 = scmp.ne.s32.totalorder %s154, %s156
    %p163 = scmp.eq.s32.totalorder %s18, 1
    %p164 = por %p162, %p163
    %p165 = scmp.ne.s32.totalorder %s156, %s157
    %p166 = scmp.eq.s32.totalorder %s18, 0
    %p167 = por %p165, %p166
    %p168 = scmp.ne.s32.totalorder %s156, %s157
    %p169 = scmp.eq.s32.totalorder %s19, 1
    %p170 = por %p168, %p169
    %p172 = scmp.ne.s32.totalorder %s157, %s171
    %p173 = scmp.eq.s32.totalorder %s19, 0
    %p174 = por %p172, %p173
    %s176 = sadd.s32 %s175, 1
    %p179 = scmp.eq.s32.totalorder %s13, 1
    %p180 = scmp.ne.s32.totalorder %s175, %s177
    %p181 = scmp.eq.s32.totalorder %s13, 0
    %p182 = por %p180, %p181
    %p183 = scmp.ne.s32.totalorder %s175, %s177
    %p184 = scmp.eq.s32.totalorder %s18, 1
    %p185 = por %p183, %p184
    %p186 = scmp.ne.s32.totalorder %s177, %s178
    %p187 = scmp.eq.s32.totalorder %s18, 0
    %p188 = por %p186, %p187
    %p189 = scmp.ne.s32.totalorder %s177, %s178
    %p190 = scmp.eq.s32.totalorder %s19, 1
    %p191 = por %p189, %p190
    %p193 = scmp.ne.s32.totalorder %s178, %s192
    %p194 = scmp.eq.s32.totalorder %s19, 0
    %p195 = por %p193, %p194
    %s197 = sadd.s32 %s196, 1
    %p200 = scmp.eq.s32.totalorder %s13, 1
    %p201 = scmp.ne.s32.totalorder %s196, %s198
    %p202 = scmp.eq.s32.totalorder %s13, 0
    %p203 = por %p201, %p202
    %p204 = scmp.ne.s32.totalorder %s196, %s198
    %p205 = scmp.eq.s32.totalorder %s18, 1
    %p206 = por %p204, %p205
    %p207 = scmp.ne.s32.totalorder %s198, %s199
    %p208 = scmp.eq.s32.totalorder %s18, 0
    %p209 = por %p207, %p208
    %p210 = scmp.ne.s32.totalorder %s198, %s199
    %p211 = scmp.eq.s32.totalorder %s19, 1
    %p212 = por %p210, %p211
    %p214 = scmp.ne.s32.totalorder %s199, %s213
    %p215 = scmp.eq.s32.totalorder %s19, 0
    %p216 = por %p214, %p215
    %s217 = ssub.s32 %s20, %s32
    %s218 = ssub.s32 %s21, %s28
    %s219 = sor.u32 %s217, %s218
    %p220 = scmp.eq.s32.totalorder %s219, 0
    %s222 = sadd.s32 %s221, 1
    %s223 = scalar_select %p220, %s221, %s222
    %p226 = pneg %p220
    %p227 = scmp.eq.s32.totalorder %s13, 1
    %p228 = por %p226, %p227
    %p229 = scmp.ne.s32.totalorder %s221, %s224
    %p230 = scmp.eq.s32.totalorder %s13, 0
    %p231 = por %p229, %p230
    %p232 = scmp.ne.s32.totalorder %s221, %s224
    %p233 = scmp.eq.s32.totalorder %s18, 1
    %p234 = por %p232, %p233
    %p235 = scmp.ne.s32.totalorder %s224, %s225
    %p236 = scmp.eq.s32.totalorder %s18, 0
    %p237 = por %p235, %p236
    %p238 = scmp.ne.s32.totalorder %s224, %s225
    %p239 = scmp.eq.s32.totalorder %s19, 1
    %p240 = por %p238, %p239
    %p242 = scmp.ne.s32.totalorder %s225, %s241
    %p243 = scmp.eq.s32.totalorder %s19, 0
    %p244 = por %p242, %p243
    %p245 = scmp.le.s32.totalorder 1, %s13
    %p246 = scmp.lt.s32.totalorder %s13, 3
    %p247 = pnand %p245, %p246
    %p248 = pneg %p247
    // Predicated region
    $region9: #{tpu_custom_call.1} parent=5 // pred_check
      _
    $region10: #{tpu_custom_call.1} parent=5 // pred_check_branch
      %250 = sbr.rel (%p247) target = $region12
    $region11: #{tpu_custom_call.1} parent=5 // pred_region
      %s251 = ssub.s32 %s13, 1
      // Predicated region
      $region13: #{tpu_custom_call.1} parent=11 // pred_check
        %p252 = pneg %p146
      $region14: #{tpu_custom_call.1} parent=11 // pred_check_branch
        %254 = sbr.rel (%p252) target = $region16
      $region15: #{tpu_custom_call.1} parent=11 // pred_region
        _
      $region16: #{tpu_custom_call.1} parent=11 // pred_fallthru
        _
      // Predicated region
      $region17: #{tpu_custom_call.1} parent=11 // pred_check
        %p255 = pneg %p167
      $region18: #{tpu_custom_call.1} parent=11 // pred_check_branch
        %257 = sbr.rel (%p255) target = $region20
      $region19: #{tpu_custom_call.1} parent=11 // pred_region
        _
      $region20: #{tpu_custom_call.1} parent=11 // pred_fallthru
        _
      // Predicated region
      $region21: #{tpu_custom_call.1} parent=11 // pred_check
        %p258 = pneg %p188
      $region22: #{tpu_custom_call.1} parent=11 // pred_check_branch
        %260 = sbr.rel (%p258) target = $region24
      $region23: #{tpu_custom_call.1} parent=11 // pred_region
        _
      $region24: #{tpu_custom_call.1} parent=11 // pred_fallthru
        _
      // Predicated region
      $region25: #{tpu_custom_call.1} parent=11 // pred_check
        %p261 = pneg %p209
      $region26: #{tpu_custom_call.1} parent=11 // pred_check_branch
        %263 = sbr.rel (%p261) target = $region28
      $region27: #{tpu_custom_call.1} parent=11 // pred_region
        _
      $region28: #{tpu_custom_call.1} parent=11 // pred_fallthru
        _
    $region12: #{tpu_custom_call.1} parent=5 // pred_fallthru
      _
    %p264 = scmp.lt.s32.totalorder %s13, 2
    // Predicated region
    $region29: #{tpu_custom_call.1} parent=5 // pred_check
      %p265 = pneg %p264
    $region30: #{tpu_custom_call.1} parent=5 // pred_check_branch
      %267 = sbr.rel (%p265) target = $region32
    $region31: #{tpu_custom_call.1} parent=5 // pred_region
      // Predicated region
      $region33: #{tpu_custom_call.1} parent=31 // pred_check
        %p268 = pneg %p47
      $region34: #{tpu_custom_call.1} parent=31 // pred_check_branch
        %270 = sbr.rel (%p268) target = $region36
      $region35: #{tpu_custom_call.1} parent=31 // pred_region
        %s271 = smul.u32 16, %s21
        %p272 = scmp.lt.s32.totalorder %s20, 1
        %s273 = scalar_select %p272, %s20, 1
        %p274 = scmp.lt.s32.totalorder %s271, 15
        %s275 = scalar_select %p274, %s271, 15
        %s276 = smul.addr %s275, 2
        %s277 = smul.addr %s273, 32
        %s278 = sadd.s32 %s276, %s277
        %s279 = smul.addr %s278, 8
        %s280 = scalar_lea.vmem %s0, %s279
        %s281 = smul.u32 16, %s21
      $region36: #{tpu_custom_call.1} parent=31 // pred_fallthru
        _
      // Predicated region
      $region37: #{tpu_custom_call.1} parent=31 // pred_check
        %p282 = pneg %p83
      $region38: #{tpu_custom_call.1} parent=31 // pred_check_branch
        %284 = sbr.rel (%p282) target = $region40
      $region39: #{tpu_custom_call.1} parent=31 // pred_region
        %s285 = smul.u32 %s21, 16
        %s286 = ssub.s32 %s285, 1
        %p287 = scmp.gt.s32.totalorder %s286, 0
        %s288 = scalar_select %p287, %s286, 0
        %p289 = scmp.lt.s32.totalorder %s20, 1
        %s290 = scalar_select %p289, %s20, 1
        %p291 = scmp.lt.s32.totalorder %s288, 15
        %s292 = scalar_select %p291, %s288, 15
        %s293 = smul.addr %s292, 2
        %s294 = smul.addr %s290, 32
        %s295 = sadd.s32 %s293, %s294
        %s296 = smul.addr %s295, 8
        %s297 = scalar_lea.vmem %s1, %s296
        %s298 = smul.u32 %s21, 16
        %s299 = ssub.s32 %s298, 1
        %p300 = scmp.gt.s32.totalorder %s299, 0
        %s301 = scalar_select %p300, %s299, 0
      $region40: #{tpu_custom_call.1} parent=31 // pred_fallthru
        _
      // Predicated region
      $region41: #{tpu_custom_call.1} parent=31 // pred_check
        %p302 = pneg %p119
      $region42: #{tpu_custom_call.1} parent=31 // pred_check_branch
        %304 = sbr.rel (%p302) target = $region44
      $region43: #{tpu_custom_call.1} parent=31 // pred_region
        %s305 = smul.u32 %s21, 16
        %s306 = sadd.s32 %s305, 16
        %p307 = scmp.lt.s32.totalorder %s306, 15
        %s308 = scalar_select %p307, %s306, 15
        %p309 = scmp.lt.s32.totalorder %s20, 1
        %s310 = scalar_select %p309, %s20, 1
        %p311 = scmp.lt.s32.totalorder %s308, 15
        %s312 = scalar_select %p311, %s308, 15
        %s313 = smul.addr %s312, 2
        %s314 = smul.addr %s310, 32
        %s315 = sadd.s32 %s313, %s314
        %s316 = smul.addr %s315, 8
        %s317 = scalar_lea.vmem %s2, %s316
        %s318 = smul.u32 %s21, 16
        %s319 = sadd.s32 %s318, 16
        %p320 = scmp.lt.s32.totalorder %s319, 15
        %s321 = scalar_select %p320, %s319, 15
      $region44: #{tpu_custom_call.1} parent=31 // pred_fallthru
        _
    $region32: #{tpu_custom_call.1} parent=5 // pred_fallthru
      _
    %p322 = scmp.le.s32.totalorder 1, %s13
    %p323 = scmp.lt.s32.totalorder %s13, 3
    %p324 = pnand %p322, %p323
    %p325 = pneg %p324
    // Predicated region
    $region45: #{tpu_custom_call.1} parent=5 // pred_check
      _
    $region46: #{tpu_custom_call.1} parent=5 // pred_check_branch
      %327 = sbr.rel (%p324) target = $region48
    $region47: #{tpu_custom_call.1} parent=5 // pred_region
      %s328 = ssub.s32 %s13, 1
      %s329 = smul.u32 16, %s23
      %p330 = scmp.lt.s32.totalorder %s22, 1
      %s331 = scalar_select %p330, %s22, 1
      %p332 = scmp.lt.s32.totalorder %s329, 15
      %s333 = scalar_select %p332, %s329, 15
      %s334 = smul.addr %s333, 2
      %s335 = smul.addr %s331, 32
      %s336 = sadd.s32 %s334, %s335
      %s337 = smul.addr %s336, 8
      %s338 = scalar_lea.vmem %s0, %s337
      %p339 = pneg %p53
      %p340 = pneg %p50
      %s341 = smul.u32 %s23, 16
      %s342 = ssub.s32 %s341, 1
      %p343 = scmp.gt.s32.totalorder %s342, 0
      %s344 = scalar_select %p343, %s342, 0
      %p345 = scmp.lt.s32.totalorder %s22, 1
      %s346 = scalar_select %p345, %s22, 1
      %p347 = scmp.lt.s32.totalorder %s344, 15
      %s348 = scalar_select %p347, %s344, 15
      %s349 = smul.addr %s348, 2
      %s350 = smul.addr %s346, 32
      %s351 = sadd.s32 %s349, %s350
      %s352 = smul.addr %s351, 8
      %s353 = scalar_lea.vmem %s1, %s352
      %p354 = pneg %p89
      %p355 = pneg %p86
      %s356 = smul.u32 %s23, 16
      %s357 = sadd.s32 %s356, 16
      %p358 = scmp.lt.s32.totalorder %s357, 15
      %s359 = scalar_select %p358, %s357, 15
      %p360 = scmp.lt.s32.totalorder %s22, 1
      %s361 = scalar_select %p360, %s22, 1
      %p362 = scmp.lt.s32.totalorder %s359, 15
      %s363 = scalar_select %p362, %s359, 15
      %s364 = smul.addr %s363, 2
      %s365 = smul.addr %s361, 32
      %s366 = sadd.s32 %s364, %s365
      %s367 = smul.addr %s366, 8
      %s368 = scalar_lea.vmem %s2, %s367
      %p369 = pneg %p125
      %p370 = pneg %p122
      %p371 = pneg %p146
      %p372 = pneg %p143
      %p373 = pneg %p167
      %p374 = pneg %p164
      %p375 = pneg %p188
      %p376 = pneg %p185
      %p377 = pneg %p209
      %p378 = pneg %p206
      %p379 = pneg %p237
      %p380 = pneg %p234
      %s381 = smul.u32 16, %s23
      %p382 = scmp.lt.s32.totalorder %s22, 1
      %s383 = scalar_select %p382, %s22, 1
      %p384 = scmp.lt.s32.totalorder %s381, 15
      %s385 = scalar_select %p384, %s381, 15
      %s386 = smul.addr %s385, 2
      %s387 = smul.addr %s383, 32
      %s388 = sadd.s32 %s386, %s387
      %s389 = smul.addr %s388, 8
      %s390 = scalar_lea.vmem %s7, %s389
      %s391 = smul.u32 16, %s23
      %p392 = scmp.lt.s32.totalorder %s22, 1
      %s393 = scalar_select %p392, %s22, 1
      %p394 = scmp.lt.s32.totalorder %s391, 15
      %s395 = scalar_select %p394, %s391, 15
      %s396 = smul.addr %s395, 2
      %s397 = smul.addr %s393, 32
      %s398 = sadd.s32 %s396, %s397
      %s399 = smul.addr %s398, 8
      %s400 = scalar_lea.vmem %s0, %s399
      %s401 = smul.u32 16, %s23
      %s402 = smul.u32 %s23, 16
      %s403 = ssub.s32 %s402, 1
      %p404 = scmp.gt.s32.totalorder %s403, 0
      %s405 = scalar_select %p404, %s403, 0
      %p406 = scmp.lt.s32.totalorder %s22, 1
      %s407 = scalar_select %p406, %s22, 1
      %p408 = scmp.lt.s32.totalorder %s405, 15
      %s409 = scalar_select %p408, %s405, 15
      %s410 = smul.addr %s409, 2
      %s411 = smul.addr %s407, 32
      %s412 = sadd.s32 %s410, %s411
      %s413 = smul.addr %s412, 8
      %s414 = scalar_lea.vmem %s1, %s413
      %s415 = smul.u32 %s23, 16
      %s416 = ssub.s32 %s415, 1
      %p417 = scmp.gt.s32.totalorder %s416, 0
      %s418 = scalar_select %p417, %s416, 0
      %s419 = smul.u32 %s23, 16
      %s420 = sadd.s32 %s419, 16
      %p421 = scmp.lt.s32.totalorder %s420, 15
      %s422 = scalar_select %p421, %s420, 15
      %p423 = scmp.lt.s32.totalorder %s22, 1
      %s424 = scalar_select %p423, %s22, 1
      %p425 = scmp.lt.s32.totalorder %s422, 15
      %s426 = scalar_select %p425, %s422, 15
      %s427 = smul.addr %s426, 2
      %s428 = smul.addr %s424, 32
      %s429 = sadd.s32 %s427, %s428
      %s430 = smul.addr %s429, 8
      %s431 = scalar_lea.vmem %s2, %s430
      %s432 = smul.u32 %s23, 16
      %s433 = sadd.s32 %s432, 16
      %p434 = scmp.lt.s32.totalorder %s433, 15
      %s435 = scalar_select %p434, %s433, 15
      %s436 = smul.u32 16, %s23
      %p437 = scmp.lt.s32.totalorder %s22, 1
      %s438 = scalar_select %p437, %s22, 1
      %p439 = scmp.lt.s32.totalorder %s436, 15
      %s440 = scalar_select %p439, %s436, 15
      %s441 = smul.addr %s440, 2
      %s442 = smul.addr %s438, 32
      %s443 = sadd.s32 %s441, %s442
      %s444 = smul.addr %s443, 8
      %s445 = scalar_lea.vmem %s7, %s444
      %s446 = smul.u32 16, %s23
      %s447 = smul.u32 %s23, 16
      %s448 = sadd.s32 %s447, 16
      %p449 = scmp.ge.s32.totalorder %s448, 16
      %v450 = vld [vmem:[%s414] sm:$0xff]
      %v451 = vld [vmem:[%s414 + $0x8] sm:$0xff]
      %v452 = vld [vmem:[%s400] sm:$0xff]
      %v453 = vld [vmem:[%s400 + $0x8] sm:$0xff]
      %v454 = vld [vmem:[%s400 + $0x10] sm:$0xff]
      %v455 = vld [vmem:[%s400 + $0x18] sm:$0xff]
      %v456 = vld [vmem:[%s400 + $0x20] sm:$0xff]
      %v457 = vld [vmem:[%s400 + $0x28] sm:$0xff]
      %v458 = vld [vmem:[%s400 + $0x30] sm:$0xff]
      %v459 = vld [vmem:[%s400 + $0x38] sm:$0xff]
      %v460 = vld [vmem:[%s400 + $0x40] sm:$0xff]
      %v461 = vld [vmem:[%s400 + $0x48] sm:$0xff]
      %v462 = vld [vmem:[%s400 + $0x50] sm:$0xff]
      %v463 = vld [vmem:[%s400 + $0x58] sm:$0xff]
      %v464 = vld [vmem:[%s400 + $0x60] sm:$0xff]
      %v465 = vld [vmem:[%s400 + $0x68] sm:$0xff]
      %v466 = vld [vmem:[%s400 + $0x70] sm:$0xff]
      %v467 = vld [vmem:[%s400 + $0x78] sm:$0xff]
      %v468 = vld [vmem:[%s400 + $0x80] sm:$0xff]
      %v469 = vld [vmem:[%s400 + $0x88] sm:$0xff]
      %v470 = vld [vmem:[%s400 + $0x90] sm:$0xff]
      %v471 = vld [vmem:[%s400 + $0x98] sm:$0xff]
      %v472 = vld [vmem:[%s400 + $0xa0] sm:$0xff]
      %v473 = vld [vmem:[%s400 + $0xa8] sm:$0xff]
      %v474 = vld [vmem:[%s400 + $0xb0] sm:$0xff]
      %v475 = vld [vmem:[%s400 + $0xb8] sm:$0xff]
      %v476 = vld [vmem:[%s400 + $0xc0] sm:$0xff]
      %v477 = vld [vmem:[%s400 + $0xc8] sm:$0xff]
      %v478 = vld [vmem:[%s400 + $0xd0] sm:$0xff]
      %v479 = vld [vmem:[%s400 + $0xd8] sm:$0xff]
      %v480 = vld [vmem:[%s400 + $0xe0] sm:$0xff]
      %v481 = vld [vmem:[%s400 + $0xe8] sm:$0xff]
      %v482 = vld [vmem:[%s400 + $0xf0] sm:$0xff]
      %v483 = vld [vmem:[%s400 + $0xf8] sm:$0xff]
      %v484 = vld [vmem:[%s431] sm:$0xff]
      %v485 = vld [vmem:[%s431 + $0x8] sm:$0xff]
      %v486 = vld [vmem:[%s3] sm:$0xf]
      %v487 = vld [vmem:[%s4] sm:$0x1]
      %v489 = vlaneseq
      %v490 = vshrl.u32 %v489, 7
      %v491 = vsub.s32 0, %v490
      %v492 = vrot.slane %v487, %v491
      %vm494 = vcmask 31744
      %v496 = vsel %vm494, %v450, 0
      %v499 = vsel %vm494, %v451, 0
      %v502 = vsel %vm494, %v452, 0
      %v505 = vsel %vm494, %v453, 0
      %v508 = vsel %vm494, %v454, 0
      %v511 = vsel %vm494, %v455, 0
      %v514 = vsel %vm494, %v456, 0
      %v517 = vsel %vm494, %v457, 0
      %v520 = vsel %vm494, %v458, 0
      %v523 = vsel %vm494, %v459, 0
      %v526 = vsel %vm494, %v460, 0
      %v529 = vsel %vm494, %v461, 0
      %v532 = vsel %vm494, %v462, 0
      %v535 = vsel %vm494, %v463, 0
      %v538 = vsel %vm494, %v464, 0
      %v541 = vsel %vm494, %v465, 0
      %v544 = vsel %vm494, %v466, 0
      %v547 = vsel %vm494, %v467, 0
      %v550 = vsel %vm494, %v468, 0
      %v553 = vsel %vm494, %v469, 0
      %v556 = vsel %vm494, %v470, 0
      %v559 = vsel %vm494, %v471, 0
      %v562 = vsel %vm494, %v472, 0
      %v565 = vsel %vm494, %v473, 0
      %v568 = vsel %vm494, %v474, 0
      %v571 = vsel %vm494, %v475, 0
      %v574 = vsel %vm494, %v476, 0
      %v577 = vsel %vm494, %v477, 0
      %v580 = vsel %vm494, %v478, 0
      %v583 = vsel %vm494, %v479, 0
      %v586 = vsel %vm494, %v480, 0
      %v589 = vsel %vm494, %v481, 0
      %v592 = vsel %vm494, %v482, 0
      %v595 = vsel %vm494, %v483, 0
      %v598 = vsel %vm494, %v484, 0
      %v601 = vsel %vm494, %v485, 0
      %vm603 = vcmask 1043456
      %v605 = vsel %vm603, %v486, 0
      %607 = vmatprep.subr.mxu0 0.0
      %608 = vmatpush1.msra.mxu0 0.0
      %609 = vmatprep.subr.mxu0 0.0
      %610 = vmatpush1.msra.mxu0 0.0
      %611 = vmatprep.subr.mxu0 0.0
      %612 = vmatpush1.msra.mxu0 0.0
      %613 = vmatprep.subr.mxu0 0.0
      %614 = vmatpush1.msra.mxu0 0.0
      %615 = vmatprep.subr.mxu0 0.0
      %616 = vmatpush1.msra.mxu0 0.0
      %617 = vmatprep.subr.mxu0 0.0
      %618 = vmatpush1.msra.mxu0 0.0
      %619 = vmatprep.subr.mxu0 0.0
      %620 = vmatpush1.msra.mxu0 0.0
      %621 = vmatprep.subr.mxu0 0.0
      %622 = vmatpush1.msra.mxu0 0.0
      %623 = vmatprep.subr.mxu0 0.0
      %624 = vmatpush1.msra.mxu0 0.0
      %625 = vmatprep.subr.mxu0 0.0
      %626 = vmatpush1.msra.mxu0 0.0
      %627 = vmatprep.subr.mxu0 0.0
      %628 = vmatpush1.msra.mxu0 0.0
      %629 = vmatprep.subr.mxu0 0.0
      %630 = vmatpush1.msra.mxu0 0.0
      %631 = vmatprep.subr.mxu0 0.0
      %632 = vmatpush1.msra.mxu0 0.0
      %633 = vmatprep.subr.mxu0 0.0
      %634 = vmatpush1.msra.mxu0 0.0
      %635 = vmatprep.subr.mxu0 0.0
      %636 = vmatpush1.msra.mxu0 0.0
      %637 = vmatprep.subr.mxu0 0.0
      %638 = vmatpush1.msra.mxu0 %v605
      %639 = vmatprep.subr.mxu0 0.0
      %640 = vmatpush2.msra.mxu0 0.0
      %641 = vmatprep.subr.mxu0 0.0
      %642 = vmatpush2.msra.mxu0 0.0
      %643 = vmatprep.subr.mxu0 0.0
      %644 = vmatpush2.msra.mxu0 0.0
      %645 = vmatprep.subr.mxu0 0.0
      %646 = vmatpush2.msra.mxu0 0.0
      %647 = vmatprep.subr.mxu0 0.0
      %648 = vmatpush2.msra.mxu0 0.0
      %649 = vmatprep.subr.mxu0 0.0
      %650 = vmatpush2.msra.mxu0 0.0
      %651 = vmatprep.subr.mxu0 0.0
      %652 = vmatpush2.msra.mxu0 0.0
      %653 = vmatprep.subr.mxu0 0.0
      %654 = vmatpush2.msra.mxu0 0.0
      %655 = vmatprep.subr.mxu0 0.0
      %656 = vmatpush2.msra.mxu0 0.0
      %657 = vmatprep.subr.mxu0 0.0
      %658 = vmatpush2.msra.mxu0 0.0
      %659 = vmatprep.subr.mxu0 0.0
      %660 = vmatpush2.msra.mxu0 0.0
      %661 = vmatprep.subr.mxu0 0.0
      %662 = vmatpush2.msra.mxu0 0.0
      %663 = vmatprep.subr.mxu0 0.0
      %664 = vmatpush2.msra.mxu0 0.0
      %665 = vmatprep.subr.mxu0 0.0
      %666 = vmatpush2.msra.mxu0 0.0
      %667 = vmatprep.subr.mxu0 0.0
      %668 = vmatpush2.msra.mxu0 0.0
      %669 = vmatprep.subr.mxu0 0.0
      %670 = vmatpush2.msra.mxu0 0.0
      %671 = vmatprep.mubr.f32.mxu0 0.0
      %672 = vmatmul.mubr.f32.gmra.mxu0 %v496
      %v673 = vpop.f32.mrf.mxu0
      %v674 = vadd.f32 %v492, %v673
      %v675 = vpop.f32.mrf.mxu0
      %676 = vmatprep.mubr.f32.mxu0 0.0
      %677 = vmatmul.mubr.f32.gmra.mxu0 %v499
      %v678 = vpop.f32.mrf.mxu0
      %v679 = vadd.f32 %v492, %v678
      %v680 = vpop.f32.mrf.mxu0
      %681 = vmatprep.mubr.f32.mxu0 0.0
      %682 = vmatmul.mubr.f32.gmra.mxu0 %v502
      %v683 = vpop.f32.mrf.mxu0
      %v684 = vadd.f32 %v492, %v683
      %v685 = vpop.f32.mrf.mxu0
      %686 = vmatprep.mubr.f32.mxu0 0.0
      %687 = vmatmul.mubr.f32.gmra.mxu0 %v505
      %v688 = vpop.f32.mrf.mxu0
      %v689 = vadd.f32 %v492, %v688
      %v690 = vpop.f32.mrf.mxu0
      %691 = vmatprep.mubr.f32.mxu0 0.0
      %692 = vmatmul.mubr.f32.gmra.mxu0 %v508
      %v693 = vpop.f32.mrf.mxu0
      %v694 = vadd.f32 %v492, %v693
      %v695 = vpop.f32.mrf.mxu0
      %696 = vmatprep.mubr.f32.mxu0 0.0
      %697 = vmatmul.mubr.f32.gmra.mxu0 %v511
      %v698 = vpop.f32.mrf.mxu0
      %v699 = vadd.f32 %v492, %v698
      %v700 = vpop.f32.mrf.mxu0
      %701 = vmatprep.mubr.f32.mxu0 0.0
      %702 = vmatmul.mubr.f32.gmra.mxu0 %v514
      %v703 = vpop.f32.mrf.mxu0
      %v704 = vadd.f32 %v492, %v703
      %v705 = vpop.f32.mrf.mxu0
      %706 = vmatprep.mubr.f32.mxu0 0.0
      %707 = vmatmul.mubr.f32.gmra.mxu0 %v517
      %v708 = vpop.f32.mrf.mxu0
      %v709 = vadd.f32 %v492, %v708
      %v710 = vpop.f32.mrf.mxu0
      %711 = vmatprep.mubr.f32.mxu0 0.0
      %712 = vmatmul.mubr.f32.gmra.mxu0 %v520
      %v713 = vpop.f32.mrf.mxu0
      %v714 = vadd.f32 %v492, %v713
      %v715 = vpop.f32.mrf.mxu0
      %716 = vmatprep.mubr.f32.mxu0 0.0
      %717 = vmatmul.mubr.f32.gmra.mxu0 %v523
      %v718 = vpop.f32.mrf.mxu0
      %v719 = vadd.f32 %v492, %v718
      %v720 = vpop.f32.mrf.mxu0
      %721 = vmatprep.mubr.f32.mxu0 0.0
      %722 = vmatmul.mubr.f32.gmra.mxu0 %v526
      %v723 = vpop.f32.mrf.mxu0
      %v724 = vadd.f32 %v492, %v723
      %v725 = vpop.f32.mrf.mxu0
      %726 = vmatprep.mubr.f32.mxu0 0.0
      %727 = vmatmul.mubr.f32.gmra.mxu0 %v529
      %v728 = vpop.f32.mrf.mxu0
      %v729 = vadd.f32 %v492, %v728
      %v730 = vpop.f32.mrf.mxu0
      %731 = vmatprep.mubr.f32.mxu0 0.0
      %732 = vmatmul.mubr.f32.gmra.mxu0 %v532
      %v733 = vpop.f32.mrf.mxu0
      %v734 = vadd.f32 %v492, %v733
      %v735 = vpop.f32.mrf.mxu0
      %736 = vmatprep.mubr.f32.mxu0 0.0
      %737 = vmatmul.mubr.f32.gmra.mxu0 %v535
      %v738 = vpop.f32.mrf.mxu0
      %v739 = vadd.f32 %v492, %v738
      %v740 = vpop.f32.mrf.mxu0
      %741 = vmatprep.mubr.f32.mxu0 0.0
      %742 = vmatmul.mubr.f32.gmra.mxu0 %v538
      %v743 = vpop.f32.mrf.mxu0
      %v744 = vadd.f32 %v492, %v743
      %v745 = vpop.f32.mrf.mxu0
      %746 = vmatprep.mubr.f32.mxu0 0.0
      %747 = vmatmul.mubr.f32.gmra.mxu0 %v541
      %v748 = vpop.f32.mrf.mxu0
      %v749 = vadd.f32 %v492, %v748
      %v750 = vpop.f32.mrf.mxu0
      %751 = vmatprep.mubr.f32.mxu0 0.0
      %752 = vmatmul.mubr.f32.gmra.mxu0 %v544
      %v753 = vpop.f32.mrf.mxu0
      %v754 = vadd.f32 %v492, %v753
      %v755 = vpop.f32.mrf.mxu0
      %756 = vmatprep.mubr.f32.mxu0 0.0
      %757 = vmatmul.mubr.f32.gmra.mxu0 %v547
      %v758 = vpop.f32.mrf.mxu0
      %v759 = vadd.f32 %v492, %v758
      %v760 = vpop.f32.mrf.mxu0
      %761 = vmatprep.mubr.f32.mxu0 0.0
      %762 = vmatmul.mubr.f32.gmra.mxu0 %v550
      %v763 = vpop.f32.mrf.mxu0
      %v764 = vadd.f32 %v492, %v763
      %v765 = vpop.f32.mrf.mxu0
      %766 = vmatprep.mubr.f32.mxu0 0.0
      %767 = vmatmul.mubr.f32.gmra.mxu0 %v553
      %v768 = vpop.f32.mrf.mxu0
      %v769 = vadd.f32 %v492, %v768
      %v770 = vpop.f32.mrf.mxu0
      %771 = vmatprep.mubr.f32.mxu0 0.0
      %772 = vmatmul.mubr.f32.gmra.mxu0 %v556
      %v773 = vpop.f32.mrf.mxu0
      %v774 = vadd.f32 %v492, %v773
      %v775 = vpop.f32.mrf.mxu0
      %776 = vmatprep.mubr.f32.mxu0 0.0
      %777 = vmatmul.mubr.f32.gmra.mxu0 %v559
      %v778 = vpop.f32.mrf.mxu0
      %v779 = vadd.f32 %v492, %v778
      %v780 = vpop.f32.mrf.mxu0
      %781 = vmatprep.mubr.f32.mxu0 0.0
      %782 = vmatmul.mubr.f32.gmra.mxu0 %v562
      %v783 = vpop.f32.mrf.mxu0
      %v784 = vadd.f32 %v492, %v783
      %v785 = vpop.f32.mrf.mxu0
      %786 = vmatprep.mubr.f32.mxu0 0.0
      %787 = vmatmul.mubr.f32.gmra.mxu0 %v565
      %v788 = vpop.f32.mrf.mxu0
      %v789 = vadd.f32 %v492, %v788
      %v790 = vpop.f32.mrf.mxu0
      %791 = vmatprep.mubr.f32.mxu0 0.0
      %792 = vmatmul.mubr.f32.gmra.mxu0 %v568
      %v793 = vpop.f32.mrf.mxu0
      %v794 = vadd.f32 %v492, %v793
      %v795 = vpop.f32.mrf.mxu0
      %796 = vmatprep.mubr.f32.mxu0 0.0
      %797 = vmatmul.mubr.f32.gmra.mxu0 %v571
      %v798 = vpop.f32.mrf.mxu0
      %v799 = vadd.f32 %v492, %v798
      %v800 = vpop.f32.mrf.mxu0
      %801 = vmatprep.mubr.f32.mxu0 0.0
      %802 = vmatmul.mubr.f32.gmra.mxu0 %v574
      %v803 = vpop.f32.mrf.mxu0
      %v804 = vadd.f32 %v492, %v803
      %v805 = vpop.f32.mrf.mxu0
      %806 = vmatprep.mubr.f32.mxu0 0.0
      %807 = vmatmul.mubr.f32.gmra.mxu0 %v577
      %v808 = vpop.f32.mrf.mxu0
      %v809 = vadd.f32 %v492, %v808
      %v810 = vpop.f32.mrf.mxu0
      %811 = vmatprep.mubr.f32.mxu0 0.0
      %812 = vmatmul.mubr.f32.gmra.mxu0 %v580
      %v813 = vpop.f32.mrf.mxu0
      %v814 = vadd.f32 %v492, %v813
      %v815 = vpop.f32.mrf.mxu0
      %816 = vmatprep.mubr.f32.mxu0 0.0
      %817 = vmatmul.mubr.f32.gmra.mxu0 %v583
      %v818 = vpop.f32.mrf.mxu0
      %v819 = vadd.f32 %v492, %v818
      %v820 = vpop.f32.mrf.mxu0
      %821 = vmatprep.mubr.f32.mxu0 0.0
      %822 = vmatmul.mubr.f32.gmra.mxu0 %v586
      %v823 = vpop.f32.mrf.mxu0
      %v824 = vadd.f32 %v492, %v823
      %v825 = vpop.f32.mrf.mxu0
      %826 = vmatprep.mubr.f32.mxu0 0.0
      %827 = vmatmul.mubr.f32.gmra.mxu0 %v589
      %v828 = vpop.f32.mrf.mxu0
      %v829 = vadd.f32 %v492, %v828
      %v830 = vpop.f32.mrf.mxu0
      %831 = vmatprep.mubr.f32.mxu0 0.0
      %832 = vmatmul.mubr.f32.gmra.mxu0 %v592
      %v833 = vpop.f32.mrf.mxu0
      %v834 = vadd.f32 %v492, %v833
      %v835 = vpop.f32.mrf.mxu0
      %836 = vmatprep.mubr.f32.mxu0 0.0
      %837 = vmatmul.mubr.f32.gmra.mxu0 %v595
      %v838 = vpop.f32.mrf.mxu0
      %v839 = vadd.f32 %v492, %v838
      %v840 = vpop.f32.mrf.mxu0
      %841 = vmatprep.mubr.f32.mxu0 0.0
      %842 = vmatmul.mubr.f32.gmra.mxu0 %v598
      %v843 = vpop.f32.mrf.mxu0
      %v844 = vadd.f32 %v492, %v843
      %v845 = vpop.f32.mrf.mxu0
      %846 = vmatprep.mubr.f32.mxu0 0.0
      %847 = vmatmul.mubr.f32.gmra.mxu0 %v601
      %v848 = vpop.f32.mrf.mxu0
      %v849 = vadd.f32 %v492, %v848
      %v850 = vpop.f32.mrf.mxu0
      %851 = vdwg.mxu0
      %v852 = vmax.f32 %v674, 0.0
      %v853 = vmax.f32 %v679, 0.0
      %v854 = vmax.f32 %v684, 0.0
      %v855 = vmax.f32 %v689, 0.0
      %v856 = vmax.f32 %v694, 0.0
      %v857 = vmax.f32 %v699, 0.0
      %v858 = vmax.f32 %v704, 0.0
      %v859 = vmax.f32 %v709, 0.0
      %v860 = vmax.f32 %v714, 0.0
      %v861 = vmax.f32 %v719, 0.0
      %v862 = vmax.f32 %v724, 0.0
      %v863 = vmax.f32 %v729, 0.0
      %v864 = vmax.f32 %v734, 0.0
      %v865 = vmax.f32 %v739, 0.0
      %v866 = vmax.f32 %v744, 0.0
      %v867 = vmax.f32 %v749, 0.0
      %v868 = vmax.f32 %v754, 0.0
      %v869 = vmax.f32 %v759, 0.0
      %v870 = vmax.f32 %v764, 0.0
      %v871 = vmax.f32 %v769, 0.0
      %v872 = vmax.f32 %v774, 0.0
      %v873 = vmax.f32 %v779, 0.0
      %v874 = vmax.f32 %v784, 0.0
      %v875 = vmax.f32 %v789, 0.0
      %v876 = vmax.f32 %v794, 0.0
      %v877 = vmax.f32 %v799, 0.0
      %v878 = vmax.f32 %v804, 0.0
      %v879 = vmax.f32 %v809, 0.0
      %v880 = vmax.f32 %v814, 0.0
      %v881 = vmax.f32 %v819, 0.0
      %v882 = vmax.f32 %v824, 0.0
      %v883 = vmax.f32 %v829, 0.0
      %v884 = vmax.f32 %v834, 0.0
      %v885 = vmax.f32 %v839, 0.0
      %v886 = vmax.f32 %v844, 0.0
      %v887 = vmax.f32 %v849, 0.0
      %p888 = scmp.gt.s32.totalorder %s447, 0
      %s889 = scalar_select %p888, 1, 0
      %v890 = vstv %s889
      %vm891 = vcmp.eq.s32.totalorder %v890, 1
      %v892 = vsel %vm891, %v852, 0.0
      %v893 = vsel %vm891, %v853, 0.0
      %s894 = scalar_select %p449, 1, 0
      %v895 = vstv %s894
      %vm896 = vcmp.eq.s32.totalorder %v895, 1
      %v897 = vsel %vm896, 0.0, %v886
      %v898 = vsel %vm896, 0.0, %v887
      %899 = vst.msk [vmem:[%s445] sm:$0xff] %vm494, %v854
      %900 = vst.msk [vmem:[%s445 + $0x8] sm:$0xff] %vm494, %v855
      %901 = vst.msk [vmem:[%s445 + $0x10] sm:$0xff] %vm494, %v856
      %902 = vst.msk [vmem:[%s445 + $0x18] sm:$0xff] %vm494, %v857
      %903 = vst.msk [vmem:[%s445 + $0x20] sm:$0xff] %vm494, %v858
      %904 = vst.msk [vmem:[%s445 + $0x28] sm:$0xff] %vm494, %v859
      %905 = vst.msk [vmem:[%s445 + $0x30] sm:$0xff] %vm494, %v860
      %906 = vst.msk [vmem:[%s445 + $0x38] sm:$0xff] %vm494, %v861
      %907 = vst.msk [vmem:[%s445 + $0x40] sm:$0xff] %vm494, %v862
      %908 = vst.msk [vmem:[%s445 + $0x48] sm:$0xff] %vm494, %v863
      %909 = vst.msk [vmem:[%s445 + $0x50] sm:$0xff] %vm494, %v864
      %910 = vst.msk [vmem:[%s445 + $0x58] sm:$0xff] %vm494, %v865
      %911 = vst.msk [vmem:[%s445 + $0x60] sm:$0xff] %vm494, %v866
      %912 = vst.msk [vmem:[%s445 + $0x68] sm:$0xff] %vm494, %v867
      %913 = vst.msk [vmem:[%s445 + $0x70] sm:$0xff] %vm494, %v868
      %914 = vst.msk [vmem:[%s445 + $0x78] sm:$0xff] %vm494, %v869
      %915 = vst.msk [vmem:[%s445 + $0x80] sm:$0xff] %vm494, %v870
      %916 = vst.msk [vmem:[%s445 + $0x88] sm:$0xff] %vm494, %v871
      %917 = vst.msk [vmem:[%s445 + $0x90] sm:$0xff] %vm494, %v872
      %918 = vst.msk [vmem:[%s445 + $0x98] sm:$0xff] %vm494, %v873
      %919 = vst.msk [vmem:[%s445 + $0xa0] sm:$0xff] %vm494, %v874
      %920 = vst.msk [vmem:[%s445 + $0xa8] sm:$0xff] %vm494, %v875
      %921 = vst.msk [vmem:[%s445 + $0xb0] sm:$0xff] %vm494, %v876
      %922 = vst.msk [vmem:[%s445 + $0xb8] sm:$0xff] %vm494, %v877
      %923 = vst.msk [vmem:[%s445 + $0xc0] sm:$0xff] %vm494, %v878
      %924 = vst.msk [vmem:[%s445 + $0xc8] sm:$0xff] %vm494, %v879
      %925 = vst.msk [vmem:[%s445 + $0xd0] sm:$0xff] %vm494, %v880
      %926 = vst.msk [vmem:[%s445 + $0xd8] sm:$0xff] %vm494, %v881
      %927 = vst.msk [vmem:[%s445 + $0xe0] sm:$0xff] %vm494, %v882
      %928 = vst.msk [vmem:[%s445 + $0xe8] sm:$0xff] %vm494, %v883
      %929 = vst.msk [vmem:[%s445 + $0xf0] sm:$0xff] %vm494, %v884
      %930 = vst.msk [vmem:[%s445 + $0xf8] sm:$0xff] %vm494, %v885
      %vm967 = vcmask 1040384
      %v968 = vrot.slane %v892, 7
      %v969 = vrot.slane %v893, 7
      %v970 = vsel %vm967, %v968, %v969
      %v971 = vrot.slane %v854, 7
      %v972 = vrot.slane %v855, 7
      %v973 = vsel %vm967, %v971, %v972
      %v974 = vrot.slane %v856, 7
      %v975 = vrot.slane %v857, 7
      %v976 = vsel %vm967, %v974, %v975
      %v977 = vrot.slane %v858, 7
      %v978 = vrot.slane %v859, 7
      %v979 = vsel %vm967, %v977, %v978
      %v980 = vrot.slane %v860, 7
      %v981 = vrot.slane %v861, 7
      %v982 = vsel %vm967, %v980, %v981
      %v983 = vrot.slane %v862, 7
      %v984 = vrot.slane %v863, 7
      %v985 = vsel %vm967, %v983, %v984
      %v986 = vrot.slane %v864, 7
      %v987 = vrot.slane %v865, 7
      %v988 = vsel %vm967, %v986, %v987
      %v989 = vrot.slane %v866, 7
      %v990 = vrot.slane %v867, 7
      %v991 = vsel %vm967, %v989, %v990
      %v992 = vrot.slane %v868, 7
      %v993 = vrot.slane %v869, 7
      %v994 = vsel %vm967, %v992, %v993
      %v995 = vrot.slane %v870, 7
      %v996 = vrot.slane %v871, 7
      %v997 = vsel %vm967, %v995, %v996
      %v998 = vrot.slane %v872, 7
      %v999 = vrot.slane %v873, 7
      %v1000 = vsel %vm967, %v998, %v999
      %v1001 = vrot.slane %v874, 7
      %v1002 = vrot.slane %v875, 7
      %v1003 = vsel %vm967, %v1001, %v1002
      %v1004 = vrot.slane %v876, 7
      %v1005 = vrot.slane %v877, 7
      %v1006 = vsel %vm967, %v1004, %v1005
      %v1007 = vrot.slane %v878, 7
      %v1008 = vrot.slane %v879, 7
      %v1009 = vsel %vm967, %v1007, %v1008
      %v1010 = vrot.slane %v880, 7
      %v1011 = vrot.slane %v881, 7
      %v1012 = vsel %vm967, %v1010, %v1011
      %v1013 = vrot.slane %v882, 7
      %v1014 = vrot.slane %v883, 7
      %v1015 = vsel %vm967, %v1013, %v1014
      %v1016 = vrot.slane %v884, 7
      %v1017 = vrot.slane %v885, 7
      %v1018 = vsel %vm967, %v1016, %v1017
      %v1019 = vrot.slane %v897, 7
      %v1020 = vrot.slane %v898, 7
      %v1021 = vsel %vm967, %v1019, %v1020
      %v1076 = vsel %vm967, 0.0, %v968
      %v1077 = vsel %vm967, 0.0, %v971
      %v1078 = vsel %vm967, 0.0, %v974
      %v1079 = vsel %vm967, 0.0, %v977
      %v1080 = vsel %vm967, 0.0, %v980
      %v1081 = vsel %vm967, 0.0, %v983
      %v1082 = vsel %vm967, 0.0, %v986
      %v1083 = vsel %vm967, 0.0, %v989
      %v1084 = vsel %vm967, 0.0, %v992
      %v1085 = vsel %vm967, 0.0, %v995
      %v1086 = vsel %vm967, 0.0, %v998
      %v1087 = vsel %vm967, 0.0, %v1001
      %v1088 = vsel %vm967, 0.0, %v1004
      %v1089 = vsel %vm967, 0.0, %v1007
      %v1090 = vsel %vm967, 0.0, %v1010
      %v1091 = vsel %vm967, 0.0, %v1013
      %v1092 = vsel %vm967, 0.0, %v1016
      %v1093 = vsel %vm967, 0.0, %v1019
      %v1094 = vsel %vm967, %v969, 0.0
      %v1095 = vsel %vm967, %v972, 0.0
      %v1096 = vsel %vm967, %v975, 0.0
      %v1097 = vsel %vm967, %v978, 0.0
      %v1098 = vsel %vm967, %v981, 0.0
      %v1099 = vsel %vm967, %v984, 0.0
      %v1100 = vsel %vm967, %v987, 0.0
      %v1101 = vsel %vm967, %v990, 0.0
      %v1102 = vsel %vm967, %v993, 0.0
      %v1103 = vsel %vm967, %v996, 0.0
      %v1104 = vsel %vm967, %v999, 0.0
      %v1105 = vsel %vm967, %v1002, 0.0
      %v1106 = vsel %vm967, %v1005, 0.0
      %v1107 = vsel %vm967, %v1008, 0.0
      %v1108 = vsel %vm967, %v1011, 0.0
      %v1109 = vsel %vm967, %v1014, 0.0
      %v1110 = vsel %vm967, %v1017, 0.0
      %v1111 = vsel %vm967, %v1020, 0.0
      %v1112 = vld [vmem:[%s5] sm:$0x7]
      %v1113 = vld [vmem:[%s5 + $0x4] sm:$0x7]
      %v1114 = vld [vmem:[%s5 + $0x8] sm:$0x7]
      %v1115 = vlaneseq
      %v1116 = vshrl.u32 %v1115, 7
      %v1117 = vsub.s32 0, %v1116
      %v1118 = vrot.slane %v1112, %v1117
      %v1119 = vmul.f32 %v1076, %v1118
      %v1120 = vmul.f32 %v970, %v1118
      %v1121 = vmul.f32 %v1077, %v1118
      %v1122 = vmul.f32 %v973, %v1118
      %v1123 = vmul.f32 %v1078, %v1118
      %v1124 = vmul.f32 %v976, %v1118
      %v1125 = vmul.f32 %v1079, %v1118
      %v1126 = vmul.f32 %v979, %v1118
      %v1127 = vmul.f32 %v1080, %v1118
      %v1128 = vmul.f32 %v982, %v1118
      %v1129 = vmul.f32 %v1081, %v1118
      %v1130 = vmul.f32 %v985, %v1118
      %v1131 = vmul.f32 %v1082, %v1118
      %v1132 = vmul.f32 %v988, %v1118
      %v1133 = vmul.f32 %v1083, %v1118
      %v1134 = vmul.f32 %v991, %v1118
      %v1135 = vmul.f32 %v1084, %v1118
      %v1136 = vmul.f32 %v994, %v1118
      %v1137 = vmul.f32 %v1085, %v1118
      %v1138 = vmul.f32 %v997, %v1118
      %v1139 = vmul.f32 %v1086, %v1118
      %v1140 = vmul.f32 %v1000, %v1118
      %v1141 = vmul.f32 %v1087, %v1118
      %v1142 = vmul.f32 %v1003, %v1118
      %v1143 = vmul.f32 %v1088, %v1118
      %v1144 = vmul.f32 %v1006, %v1118
      %v1145 = vmul.f32 %v1089, %v1118
      %v1146 = vmul.f32 %v1009, %v1118
      %v1147 = vmul.f32 %v1090, %v1118
      %v1148 = vmul.f32 %v1012, %v1118
      %v1149 = vmul.f32 %v1091, %v1118
      %v1150 = vmul.f32 %v1015, %v1118
      %v1151 = vadd.f32 %v1119, 0.0
      %v1152 = vadd.f32 %v1120, 0.0
      %v1153 = vadd.f32 %v1121, 0.0
      %v1154 = vadd.f32 %v1122, 0.0
      %v1155 = vadd.f32 %v1123, 0.0
      %v1156 = vadd.f32 %v1124, 0.0
      %v1157 = vadd.f32 %v1125, 0.0
      %v1158 = vadd.f32 %v1126, 0.0
      %v1159 = vadd.f32 %v1127, 0.0
      %v1160 = vadd.f32 %v1128, 0.0
      %v1161 = vadd.f32 %v1129, 0.0
      %v1162 = vadd.f32 %v1130, 0.0
      %v1163 = vadd.f32 %v1131, 0.0
      %v1164 = vadd.f32 %v1132, 0.0
      %v1165 = vadd.f32 %v1133, 0.0
      %v1166 = vadd.f32 %v1134, 0.0
      %v1167 = vadd.f32 %v1135, 0.0
      %v1168 = vadd.f32 %v1136, 0.0
      %v1169 = vadd.f32 %v1137, 0.0
      %v1170 = vadd.f32 %v1138, 0.0
      %v1171 = vadd.f32 %v1139, 0.0
      %v1172 = vadd.f32 %v1140, 0.0
      %v1173 = vadd.f32 %v1141, 0.0
      %v1174 = vadd.f32 %v1142, 0.0
      %v1175 = vadd.f32 %v1143, 0.0
      %v1176 = vadd.f32 %v1144, 0.0
      %v1177 = vadd.f32 %v1145, 0.0
      %v1178 = vadd.f32 %v1146, 0.0
      %v1179 = vadd.f32 %v1147, 0.0
      %v1180 = vadd.f32 %v1148, 0.0
      %v1181 = vadd.f32 %v1149, 0.0
      %v1182 = vadd.f32 %v1150, 0.0
      %v1183 = vlaneseq
      %v1184 = vshrl.u32 %v1183, 7
      %v1185 = vsub.s32 1, %v1184
      %v1186 = vrot.slane %v1112, %v1185
      %v1187 = vmul.f32 %v1076, %v1186
      %v1188 = vmul.f32 %v970, %v1186
      %v1189 = vmul.f32 %v1094, %v1186
      %v1190 = vmul.f32 %v1077, %v1186
      %v1191 = vmul.f32 %v973, %v1186
      %v1192 = vmul.f32 %v1095, %v1186
      %v1193 = vmul.f32 %v1078, %v1186
      %v1194 = vmul.f32 %v976, %v1186
      %v1195 = vmul.f32 %v1096, %v1186
      %v1196 = vmul.f32 %v1079, %v1186
      %v1197 = vmul.f32 %v979, %v1186
      %v1198 = vmul.f32 %v1097, %v1186
      %v1199 = vmul.f32 %v1080, %v1186
      %v1200 = vmul.f32 %v982, %v1186
      %v1201 = vmul.f32 %v1098, %v1186
      %v1202 = vmul.f32 %v1081, %v1186
      %v1203 = vmul.f32 %v985, %v1186
      %v1204 = vmul.f32 %v1099, %v1186
      %v1205 = vmul.f32 %v1082, %v1186
      %v1206 = vmul.f32 %v988, %v1186
      %v1207 = vmul.f32 %v1100, %v1186
      %v1208 = vmul.f32 %v1083, %v1186
      %v1209 = vmul.f32 %v991, %v1186
      %v1210 = vmul.f32 %v1101, %v1186
      %v1211 = vmul.f32 %v1084, %v1186
      %v1212 = vmul.f32 %v994, %v1186
      %v1213 = vmul.f32 %v1102, %v1186
      %v1214 = vmul.f32 %v1085, %v1186
      %v1215 = vmul.f32 %v997, %v1186
      %v1216 = vmul.f32 %v1103, %v1186
      %v1217 = vmul.f32 %v1086, %v1186
      %v1218 = vmul.f32 %v1000, %v1186
      %v1219 = vmul.f32 %v1104, %v1186
      %v1220 = vmul.f32 %v1087, %v1186
      %v1221 = vmul.f32 %v1003, %v1186
      %v1222 = vmul.f32 %v1105, %v1186
      %v1223 = vmul.f32 %v1088, %v1186
      %v1224 = vmul.f32 %v1006, %v1186
      %v1225 = vmul.f32 %v1106, %v1186
      %v1226 = vmul.f32 %v1089, %v1186
      %v1227 = vmul.f32 %v1009, %v1186
      %v1228 = vmul.f32 %v1107, %v1186
      %v1229 = vmul.f32 %v1090, %v1186
      %v1230 = vmul.f32 %v1012, %v1186
      %v1231 = vmul.f32 %v1108, %v1186
      %v1232 = vmul.f32 %v1091, %v1186
      %v1233 = vmul.f32 %v1015, %v1186
      %v1234 = vmul.f32 %v1109, %v1186
      %vm1283 = vcmask 1046528
      %v1284 = vrot.slane %v1187, 1
      %v1285 = vrot.slane %v1188, 1
      %v1286 = vsel %vm1283, %v1284, %v1285
      %v1287 = vrot.slane %v1189, 1
      %v1288 = vsel %vm1283, %v1285, %v1287
      %v1289 = vrot.slane %v1190, 1
      %v1290 = vrot.slane %v1191, 1
      %v1291 = vsel %vm1283, %v1289, %v1290
      %v1292 = vrot.slane %v1192, 1
      %v1293 = vsel %vm1283, %v1290, %v1292
      %v1294 = vrot.slane %v1193, 1
      %v1295 = vrot.slane %v1194, 1
      %v1296 = vsel %vm1283, %v1294, %v1295
      %v1297 = vrot.slane %v1195, 1
      %v1298 = vsel %vm1283, %v1295, %v1297
      %v1299 = vrot.slane %v1196, 1
      %v1300 = vrot.slane %v1197, 1
      %v1301 = vsel %vm1283, %v1299, %v1300
      %v1302 = vrot.slane %v1198, 1
      %v1303 = vsel %vm1283, %v1300, %v1302
      %v1304 = vrot.slane %v1199, 1
      %v1305 = vrot.slane %v1200, 1
      %v1306 = vsel %vm1283, %v1304, %v1305
      %v1307 = vrot.slane %v1201, 1
      %v1308 = vsel %vm1283, %v1305, %v1307
      %v1309 = vrot.slane %v1202, 1
      %v1310 = vrot.slane %v1203, 1
      %v1311 = vsel %vm1283, %v1309, %v1310
      %v1312 = vrot.slane %v1204, 1
      %v1313 = vsel %vm1283, %v1310, %v1312
      %v1314 = vrot.slane %v1205, 1
      %v1315 = vrot.slane %v1206, 1
      %v1316 = vsel %vm1283, %v1314, %v1315
      %v1317 = vrot.slane %v1207, 1
      %v1318 = vsel %vm1283, %v1315, %v1317
      %v1319 = vrot.slane %v1208, 1
      %v1320 = vrot.slane %v1209, 1
      %v1321 = vsel %vm1283, %v1319, %v1320
      %v1322 = vrot.slane %v1210, 1
      %v1323 = vsel %vm1283, %v1320, %v1322
      %v1324 = vrot.slane %v1211, 1
      %v1325 = vrot.slane %v1212, 1
      %v1326 = vsel %vm1283, %v1324, %v1325
      %v1327 = vrot.slane %v1213, 1
      %v1328 = vsel %vm1283, %v1325, %v1327
      %v1329 = vrot.slane %v1214, 1
      %v1330 = vrot.slane %v1215, 1
      %v1331 = vsel %vm1283, %v1329, %v1330
      %v1332 = vrot.slane %v1216, 1
      %v1333 = vsel %vm1283, %v1330, %v1332
      %v1334 = vrot.slane %v1217, 1
      %v1335 = vrot.slane %v1218, 1
      %v1336 = vsel %vm1283, %v1334, %v1335
      %v1337 = vrot.slane %v1219, 1
      %v1338 = vsel %vm1283, %v1335, %v1337
      %v1339 = vrot.slane %v1220, 1
      %v1340 = vrot.slane %v1221, 1
      %v1341 = vsel %vm1283, %v1339, %v1340
      %v1342 = vrot.slane %v1222, 1
      %v1343 = vsel %vm1283, %v1340, %v1342
      %v1344 = vrot.slane %v1223, 1
      %v1345 = vrot.slane %v1224, 1
      %v1346 = vsel %vm1283, %v1344, %v1345
      %v1347 = vrot.slane %v1225, 1
      %v1348 = vsel %vm1283, %v1345, %v1347
      %v1349 = vrot.slane %v1226, 1
      %v1350 = vrot.slane %v1227, 1
      %v1351 = vsel %vm1283, %v1349, %v1350
      %v1352 = vrot.slane %v1228, 1
      %v1353 = vsel %vm1283, %v1350, %v1352
      %v1354 = vrot.slane %v1229, 1
      %v1355 = vrot.slane %v1230, 1
      %v1356 = vsel %vm1283, %v1354, %v1355
      %v1357 = vrot.slane %v1231, 1
      %v1358 = vsel %vm1283, %v1355, %v1357
      %v1359 = vrot.slane %v1232, 1
      %v1360 = vrot.slane %v1233, 1
      %v1361 = vsel %vm1283, %v1359, %v1360
      %v1362 = vrot.slane %v1234, 1
      %v1363 = vsel %vm1283, %v1360, %v1362
      %v1396 = vadd.f32 %v1151, %v1286
      %v1397 = vadd.f32 %v1152, %v1288
      %v1398 = vadd.f32 %v1153, %v1291
      %v1399 = vadd.f32 %v1154, %v1293
      %v1400 = vadd.f32 %v1155, %v1296
      %v1401 = vadd.f32 %v1156, %v1298
      %v1402 = vadd.f32 %v1157, %v1301
      %v1403 = vadd.f32 %v1158, %v1303
      %v1404 = vadd.f32 %v1159, %v1306
      %v1405 = vadd.f32 %v1160, %v1308
      %v1406 = vadd.f32 %v1161, %v1311
      %v1407 = vadd.f32 %v1162, %v1313
      %v1408 = vadd.f32 %v1163, %v1316
      %v1409 = vadd.f32 %v1164, %v1318
      %v1410 = vadd.f32 %v1165, %v1321
      %v1411 = vadd.f32 %v1166, %v1323
      %v1412 = vadd.f32 %v1167, %v1326
      %v1413 = vadd.f32 %v1168, %v1328
      %v1414 = vadd.f32 %v1169, %v1331
      %v1415 = vadd.f32 %v1170, %v1333
      %v1416 = vadd.f32 %v1171, %v1336
      %v1417 = vadd.f32 %v1172, %v1338
      %v1418 = vadd.f32 %v1173, %v1341
      %v1419 = vadd.f32 %v1174, %v1343
      %v1420 = vadd.f32 %v1175, %v1346
      %v1421 = vadd.f32 %v1176, %v1348
      %v1422 = vadd.f32 %v1177, %v1351
      %v1423 = vadd.f32 %v1178, %v1353
      %v1424 = vadd.f32 %v1179, %v1356
      %v1425 = vadd.f32 %v1180, %v1358
      %v1426 = vadd.f32 %v1181, %v1361
      %v1427 = vadd.f32 %v1182, %v1363
      %v1428 = vlaneseq
      %v1429 = vshrl.u32 %v1428, 7
      %v1430 = vsub.s32 2, %v1429
      %v1431 = vrot.slane %v1112, %v1430
      %v1432 = vmul.f32 %v1076, %v1431
      %v1433 = vmul.f32 %v970, %v1431
      %v1434 = vmul.f32 %v1094, %v1431
      %v1435 = vmul.f32 %v1077, %v1431
      %v1436 = vmul.f32 %v973, %v1431
      %v1437 = vmul.f32 %v1095, %v1431
      %v1438 = vmul.f32 %v1078, %v1431
      %v1439 = vmul.f32 %v976, %v1431
      %v1440 = vmul.f32 %v1096, %v1431
      %v1441 = vmul.f32 %v1079, %v1431
      %v1442 = vmul.f32 %v979, %v1431
      %v1443 = vmul.f32 %v1097, %v1431
      %v1444 = vmul.f32 %v1080, %v1431
      %v1445 = vmul.f32 %v982, %v1431
      %v1446 = vmul.f32 %v1098, %v1431
      %v1447 = vmul.f32 %v1081, %v1431
      %v1448 = vmul.f32 %v985, %v1431
      %v1449 = vmul.f32 %v1099, %v1431
      %v1450 = vmul.f32 %v1082, %v1431
      %v1451 = vmul.f32 %v988, %v1431
      %v1452 = vmul.f32 %v1100, %v1431
      %v1453 = vmul.f32 %v1083, %v1431
      %v1454 = vmul.f32 %v991, %v1431
      %v1455 = vmul.f32 %v1101, %v1431
      %v1456 = vmul.f32 %v1084, %v1431
      %v1457 = vmul.f32 %v994, %v1431
      %v1458 = vmul.f32 %v1102, %v1431
      %v1459 = vmul.f32 %v1085, %v1431
      %v1460 = vmul.f32 %v997, %v1431
      %v1461 = vmul.f32 %v1103, %v1431
      %v1462 = vmul.f32 %v1086, %v1431
      %v1463 = vmul.f32 %v1000, %v1431
      %v1464 = vmul.f32 %v1104, %v1431
      %v1465 = vmul.f32 %v1087, %v1431
      %v1466 = vmul.f32 %v1003, %v1431
      %v1467 = vmul.f32 %v1105, %v1431
      %v1468 = vmul.f32 %v1088, %v1431
      %v1469 = vmul.f32 %v1006, %v1431
      %v1470 = vmul.f32 %v1106, %v1431
      %v1471 = vmul.f32 %v1089, %v1431
      %v1472 = vmul.f32 %v1009, %v1431
      %v1473 = vmul.f32 %v1107, %v1431
      %v1474 = vmul.f32 %v1090, %v1431
      %v1475 = vmul.f32 %v1012, %v1431
      %v1476 = vmul.f32 %v1108, %v1431
      %v1477 = vmul.f32 %v1091, %v1431
      %v1478 = vmul.f32 %v1015, %v1431
      %v1479 = vmul.f32 %v1109, %v1431
      %vm1528 = vcmask 1045504
      %v1529 = vrot.slane %v1432, 2
      %v1530 = vrot.slane %v1433, 2
      %v1531 = vsel %vm1528, %v1529, %v1530
      %v1532 = vrot.slane %v1434, 2
      %v1533 = vsel %vm1528, %v1530, %v1532
      %v1534 = vrot.slane %v1435, 2
      %v1535 = vrot.slane %v1436, 2
      %v1536 = vsel %vm1528, %v1534, %v1535
      %v1537 = vrot.slane %v1437, 2
      %v1538 = vsel %vm1528, %v1535, %v1537
      %v1539 = vrot.slane %v1438, 2
      %v1540 = vrot.slane %v1439, 2
      %v1541 = vsel %vm1528, %v1539, %v1540
      %v1542 = vrot.slane %v1440, 2
      %v1543 = vsel %vm1528, %v1540, %v1542
      %v1544 = vrot.slane %v1441, 2
      %v1545 = vrot.slane %v1442, 2
      %v1546 = vsel %vm1528, %v1544, %v1545
      %v1547 = vrot.slane %v1443, 2
      %v1548 = vsel %vm1528, %v1545, %v1547
      %v1549 = vrot.slane %v1444, 2
      %v1550 = vrot.slane %v1445, 2
      %v1551 = vsel %vm1528, %v1549, %v1550
      %v1552 = vrot.slane %v1446, 2
      %v1553 = vsel %vm1528, %v1550, %v1552
      %v1554 = vrot.slane %v1447, 2
      %v1555 = vrot.slane %v1448, 2
      %v1556 = vsel %vm1528, %v1554, %v1555
      %v1557 = vrot.slane %v1449, 2
      %v1558 = vsel %vm1528, %v1555, %v1557
      %v1559 = vrot.slane %v1450, 2
      %v1560 = vrot.slane %v1451, 2
      %v1561 = vsel %vm1528, %v1559, %v1560
      %v1562 = vrot.slane %v1452, 2
      %v1563 = vsel %vm1528, %v1560, %v1562
      %v1564 = vrot.slane %v1453, 2
      %v1565 = vrot.slane %v1454, 2
      %v1566 = vsel %vm1528, %v1564, %v1565
      %v1567 = vrot.slane %v1455, 2
      %v1568 = vsel %vm1528, %v1565, %v1567
      %v1569 = vrot.slane %v1456, 2
      %v1570 = vrot.slane %v1457, 2
      %v1571 = vsel %vm1528, %v1569, %v1570
      %v1572 = vrot.slane %v1458, 2
      %v1573 = vsel %vm1528, %v1570, %v1572
      %v1574 = vrot.slane %v1459, 2
      %v1575 = vrot.slane %v1460, 2
      %v1576 = vsel %vm1528, %v1574, %v1575
      %v1577 = vrot.slane %v1461, 2
      %v1578 = vsel %vm1528, %v1575, %v1577
      %v1579 = vrot.slane %v1462, 2
      %v1580 = vrot.slane %v1463, 2
      %v1581 = vsel %vm1528, %v1579, %v1580
      %v1582 = vrot.slane %v1464, 2
      %v1583 = vsel %vm1528, %v1580, %v1582
      %v1584 = vrot.slane %v1465, 2
      %v1585 = vrot.slane %v1466, 2
      %v1586 = vsel %vm1528, %v1584, %v1585
      %v1587 = vrot.slane %v1467, 2
      %v1588 = vsel %vm1528, %v1585, %v1587
      %v1589 = vrot.slane %v1468, 2
      %v1590 = vrot.slane %v1469, 2
      %v1591 = vsel %vm1528, %v1589, %v1590
      %v1592 = vrot.slane %v1470, 2
      %v1593 = vsel %vm1528, %v1590, %v1592
      %v1594 = vrot.slane %v1471, 2
      %v1595 = vrot.slane %v1472, 2
      %v1596 = vsel %vm1528, %v1594, %v1595
      %v1597 = vrot.slane %v1473, 2
      %v1598 = vsel %vm1528, %v1595, %v1597
      %v1599 = vrot.slane %v1474, 2
      %v1600 = vrot.slane %v1475, 2
      %v1601 = vsel %vm1528, %v1599, %v1600
      %v1602 = vrot.slane %v1476, 2
      %v1603 = vsel %vm1528, %v1600, %v1602
      %v1604 = vrot.slane %v1477, 2
      %v1605 = vrot.slane %v1478, 2
      %v1606 = vsel %vm1528, %v1604, %v1605
      %v1607 = vrot.slane %v1479, 2
      %v1608 = vsel %vm1528, %v1605, %v1607
      %v1641 = vadd.f32 %v1396, %v1531
      %v1642 = vadd.f32 %v1397, %v1533
      %v1643 = vadd.f32 %v1398, %v1536
      %v1644 = vadd.f32 %v1399, %v1538
      %v1645 = vadd.f32 %v1400, %v1541
      %v1646 = vadd.f32 %v1401, %v1543
      %v1647 = vadd.f32 %v1402, %v1546
      %v1648 = vadd.f32 %v1403, %v1548
      %v1649 = vadd.f32 %v1404, %v1551
      %v1650 = vadd.f32 %v1405, %v1553
      %v1651 = vadd.f32 %v1406, %v1556
      %v1652 = vadd.f32 %v1407, %v1558
      %v1653 = vadd.f32 %v1408, %v1561
      %v1654 = vadd.f32 %v1409, %v1563
      %v1655 = vadd.f32 %v1410, %v1566
      %v1656 = vadd.f32 %v1411, %v1568
      %v1657 = vadd.f32 %v1412, %v1571
      %v1658 = vadd.f32 %v1413, %v1573
      %v1659 = vadd.f32 %v1414, %v1576
      %v1660 = vadd.f32 %v1415, %v1578
      %v1661 = vadd.f32 %v1416, %v1581
      %v1662 = vadd.f32 %v1417, %v1583
      %v1663 = vadd.f32 %v1418, %v1586
      %v1664 = vadd.f32 %v1419, %v1588
      %v1665 = vadd.f32 %v1420, %v1591
      %v1666 = vadd.f32 %v1421, %v1593
      %v1667 = vadd.f32 %v1422, %v1596
      %v1668 = vadd.f32 %v1423, %v1598
      %v1669 = vadd.f32 %v1424, %v1601
      %v1670 = vadd.f32 %v1425, %v1603
      %v1671 = vadd.f32 %v1426, %v1606
      %v1672 = vadd.f32 %v1427, %v1608
      %v1673 = vlaneseq
      %v1674 = vshrl.u32 %v1673, 7
      %v1675 = vsub.s32 0, %v1674
      %v1676 = vrot.slane %v1113, %v1675
      %v1677 = vmul.f32 %v1077, %v1676
      %v1678 = vmul.f32 %v973, %v1676
      %v1679 = vmul.f32 %v1078, %v1676
      %v1680 = vmul.f32 %v976, %v1676
      %v1681 = vmul.f32 %v1079, %v1676
      %v1682 = vmul.f32 %v979, %v1676
      %v1683 = vmul.f32 %v1080, %v1676
      %v1684 = vmul.f32 %v982, %v1676
      %v1685 = vmul.f32 %v1081, %v1676
      %v1686 = vmul.f32 %v985, %v1676
      %v1687 = vmul.f32 %v1082, %v1676
      %v1688 = vmul.f32 %v988, %v1676
      %v1689 = vmul.f32 %v1083, %v1676
      %v1690 = vmul.f32 %v991, %v1676
      %v1691 = vmul.f32 %v1084, %v1676
      %v1692 = vmul.f32 %v994, %v1676
      %v1693 = vmul.f32 %v1085, %v1676
      %v1694 = vmul.f32 %v997, %v1676
      %v1695 = vmul.f32 %v1086, %v1676
      %v1696 = vmul.f32 %v1000, %v1676
      %v1697 = vmul.f32 %v1087, %v1676
      %v1698 = vmul.f32 %v1003, %v1676
      %v1699 = vmul.f32 %v1088, %v1676
      %v1700 = vmul.f32 %v1006, %v1676
      %v1701 = vmul.f32 %v1089, %v1676
      %v1702 = vmul.f32 %v1009, %v1676
      %v1703 = vmul.f32 %v1090, %v1676
      %v1704 = vmul.f32 %v1012, %v1676
      %v1705 = vmul.f32 %v1091, %v1676
      %v1706 = vmul.f32 %v1015, %v1676
      %v1707 = vmul.f32 %v1092, %v1676
      %v1708 = vmul.f32 %v1018, %v1676
      %v1709 = vadd.f32 %v1641, %v1677
      %v1710 = vadd.f32 %v1642, %v1678
      %v1711 = vadd.f32 %v1643, %v1679
      %v1712 = vadd.f32 %v1644, %v1680
      %v1713 = vadd.f32 %v1645, %v1681
      %v1714 = vadd.f32 %v1646, %v1682
      %v1715 = vadd.f32 %v1647, %v1683
      %v1716 = vadd.f32 %v1648, %v1684
      %v1717 = vadd.f32 %v1649, %v1685
      %v1718 = vadd.f32 %v1650, %v1686
      %v1719 = vadd.f32 %v1651, %v1687
      %v1720 = vadd.f32 %v1652, %v1688
      %v1721 = vadd.f32 %v1653, %v1689
      %v1722 = vadd.f32 %v1654, %v1690
      %v1723 = vadd.f32 %v1655, %v1691
      %v1724 = vadd.f32 %v1656, %v1692
      %v1725 = vadd.f32 %v1657, %v1693
      %v1726 = vadd.f32 %v1658, %v1694
      %v1727 = vadd.f32 %v1659, %v1695
      %v1728 = vadd.f32 %v1660, %v1696
      %v1729 = vadd.f32 %v1661, %v1697
      %v1730 = vadd.f32 %v1662, %v1698
      %v1731 = vadd.f32 %v1663, %v1699
      %v1732 = vadd.f32 %v1664, %v1700
      %v1733 = vadd.f32 %v1665, %v1701
      %v1734 = vadd.f32 %v1666, %v1702
      %v1735 = vadd.f32 %v1667, %v1703
      %v1736 = vadd.f32 %v1668, %v1704
      %v1737 = vadd.f32 %v1669, %v1705
      %v1738 = vadd.f32 %v1670, %v1706
      %v1739 = vadd.f32 %v1671, %v1707
      %v1740 = vadd.f32 %v1672, %v1708
      %v1741 = vlaneseq
      %v1742 = vshrl.u32 %v1741, 7
      %v1743 = vsub.s32 1, %v1742
      %v1744 = vrot.slane %v1113, %v1743
      %v1745 = vmul.f32 %v1077, %v1744
      %v1746 = vmul.f32 %v973, %v1744
      %v1747 = vmul.f32 %v1095, %v1744
      %v1748 = vmul.f32 %v1078, %v1744
      %v1749 = vmul.f32 %v976, %v1744
      %v1750 = vmul.f32 %v1096, %v1744
      %v1751 = vmul.f32 %v1079, %v1744
      %v1752 = vmul.f32 %v979, %v1744
      %v1753 = vmul.f32 %v1097, %v1744
      %v1754 = vmul.f32 %v1080, %v1744
      %v1755 = vmul.f32 %v982, %v1744
      %v1756 = vmul.f32 %v1098, %v1744
      %v1757 = vmul.f32 %v1081, %v1744
      %v1758 = vmul.f32 %v985, %v1744
      %v1759 = vmul.f32 %v1099, %v1744
      %v1760 = vmul.f32 %v1082, %v1744
      %v1761 = vmul.f32 %v988, %v1744
      %v1762 = vmul.f32 %v1100, %v1744
      %v1763 = vmul.f32 %v1083, %v1744
      %v1764 = vmul.f32 %v991, %v1744
      %v1765 = vmul.f32 %v1101, %v1744
      %v1766 = vmul.f32 %v1084, %v1744
      %v1767 = vmul.f32 %v994, %v1744
      %v1768 = vmul.f32 %v1102, %v1744
      %v1769 = vmul.f32 %v1085, %v1744
      %v1770 = vmul.f32 %v997, %v1744
      %v1771 = vmul.f32 %v1103, %v1744
      %v1772 = vmul.f32 %v1086, %v1744
      %v1773 = vmul.f32 %v1000, %v1744
      %v1774 = vmul.f32 %v1104, %v1744
      %v1775 = vmul.f32 %v1087, %v1744
      %v1776 = vmul.f32 %v1003, %v1744
      %v1777 = vmul.f32 %v1105, %v1744
      %v1778 = vmul.f32 %v1088, %v1744
      %v1779 = vmul.f32 %v1006, %v1744
      %v1780 = vmul.f32 %v1106, %v1744
      %v1781 = vmul.f32 %v1089, %v1744
      %v1782 = vmul.f32 %v1009, %v1744
      %v1783 = vmul.f32 %v1107, %v1744
      %v1784 = vmul.f32 %v1090, %v1744
      %v1785 = vmul.f32 %v1012, %v1744
      %v1786 = vmul.f32 %v1108, %v1744
      %v1787 = vmul.f32 %v1091, %v1744
      %v1788 = vmul.f32 %v1015, %v1744
      %v1789 = vmul.f32 %v1109, %v1744
      %v1790 = vmul.f32 %v1092, %v1744
      %v1791 = vmul.f32 %v1018, %v1744
      %v1792 = vmul.f32 %v1110, %v1744
      %v1841 = vrot.slane %v1745, 1
      %v1842 = vrot.slane %v1746, 1
      %v1843 = vsel %vm1283, %v1841, %v1842
      %v1844 = vrot.slane %v1747, 1
      %v1845 = vsel %vm1283, %v1842, %v1844
      %v1846 = vrot.slane %v1748, 1
      %v1847 = vrot.slane %v1749, 1
      %v1848 = vsel %vm1283, %v1846, %v1847
      %v1849 = vrot.slane %v1750, 1
      %v1850 = vsel %vm1283, %v1847, %v1849
      %v1851 = vrot.slane %v1751, 1
      %v1852 = vrot.slane %v1752, 1
      %v1853 = vsel %vm1283, %v1851, %v1852
      %v1854 = vrot.slane %v1753, 1
      %v1855 = vsel %vm1283, %v1852, %v1854
      %v1856 = vrot.slane %v1754, 1
      %v1857 = vrot.slane %v1755, 1
      %v1858 = vsel %vm1283, %v1856, %v1857
      %v1859 = vrot.slane %v1756, 1
      %v1860 = vsel %vm1283, %v1857, %v1859
      %v1861 = vrot.slane %v1757, 1
      %v1862 = vrot.slane %v1758, 1
      %v1863 = vsel %vm1283, %v1861, %v1862
      %v1864 = vrot.slane %v1759, 1
      %v1865 = vsel %vm1283, %v1862, %v1864
      %v1866 = vrot.slane %v1760, 1
      %v1867 = vrot.slane %v1761, 1
      %v1868 = vsel %vm1283, %v1866, %v1867
      %v1869 = vrot.slane %v1762, 1
      %v1870 = vsel %vm1283, %v1867, %v1869
      %v1871 = vrot.slane %v1763, 1
      %v1872 = vrot.slane %v1764, 1
      %v1873 = vsel %vm1283, %v1871, %v1872
      %v1874 = vrot.slane %v1765, 1
      %v1875 = vsel %vm1283, %v1872, %v1874
      %v1876 = vrot.slane %v1766, 1
      %v1877 = vrot.slane %v1767, 1
      %v1878 = vsel %vm1283, %v1876, %v1877
      %v1879 = vrot.slane %v1768, 1
      %v1880 = vsel %vm1283, %v1877, %v1879
      %v1881 = vrot.slane %v1769, 1
      %v1882 = vrot.slane %v1770, 1
      %v1883 = vsel %vm1283, %v1881, %v1882
      %v1884 = vrot.slane %v1771, 1
      %v1885 = vsel %vm1283, %v1882, %v1884
      %v1886 = vrot.slane %v1772, 1
      %v1887 = vrot.slane %v1773, 1
      %v1888 = vsel %vm1283, %v1886, %v1887
      %v1889 = vrot.slane %v1774, 1
      %v1890 = vsel %vm1283, %v1887, %v1889
      %v1891 = vrot.slane %v1775, 1
      %v1892 = vrot.slane %v1776, 1
      %v1893 = vsel %vm1283, %v1891, %v1892
      %v1894 = vrot.slane %v1777, 1
      %v1895 = vsel %vm1283, %v1892, %v1894
      %v1896 = vrot.slane %v1778, 1
      %v1897 = vrot.slane %v1779, 1
      %v1898 = vsel %vm1283, %v1896, %v1897
      %v1899 = vrot.slane %v1780, 1
      %v1900 = vsel %vm1283, %v1897, %v1899
      %v1901 = vrot.slane %v1781, 1
      %v1902 = vrot.slane %v1782, 1
      %v1903 = vsel %vm1283, %v1901, %v1902
      %v1904 = vrot.slane %v1783, 1
      %v1905 = vsel %vm1283, %v1902, %v1904
      %v1906 = vrot.slane %v1784, 1
      %v1907 = vrot.slane %v1785, 1
      %v1908 = vsel %vm1283, %v1906, %v1907
      %v1909 = vrot.slane %v1786, 1
      %v1910 = vsel %vm1283, %v1907, %v1909
      %v1911 = vrot.slane %v1787, 1
      %v1912 = vrot.slane %v1788, 1
      %v1913 = vsel %vm1283, %v1911, %v1912
      %v1914 = vrot.slane %v1789, 1
      %v1915 = vsel %vm1283, %v1912, %v1914
      %v1916 = vrot.slane %v1790, 1
      %v1917 = vrot.slane %v1791, 1
      %v1918 = vsel %vm1283, %v1916, %v1917
      %v1919 = vrot.slane %v1792, 1
      %v1920 = vsel %vm1283, %v1917, %v1919
      %v1953 = vadd.f32 %v1709, %v1843
      %v1954 = vadd.f32 %v1710, %v1845
      %v1955 = vadd.f32 %v1711, %v1848
      %v1956 = vadd.f32 %v1712, %v1850
      %v1957 = vadd.f32 %v1713, %v1853
      %v1958 = vadd.f32 %v1714, %v1855
      %v1959 = vadd.f32 %v1715, %v1858
      %v1960 = vadd.f32 %v1716, %v1860
      %v1961 = vadd.f32 %v1717, %v1863
      %v1962 = vadd.f32 %v1718, %v1865
      %v1963 = vadd.f32 %v1719, %v1868
      %v1964 = vadd.f32 %v1720, %v1870
      %v1965 = vadd.f32 %v1721, %v1873
      %v1966 = vadd.f32 %v1722, %v1875
      %v1967 = vadd.f32 %v1723, %v1878
      %v1968 = vadd.f32 %v1724, %v1880
      %v1969 = vadd.f32 %v1725, %v1883
      %v1970 = vadd.f32 %v1726, %v1885
      %v1971 = vadd.f32 %v1727, %v1888
      %v1972 = vadd.f32 %v1728, %v1890
      %v1973 = vadd.f32 %v1729, %v1893
      %v1974 = vadd.f32 %v1730, %v1895
      %v1975 = vadd.f32 %v1731, %v1898
      %v1976 = vadd.f32 %v1732, %v1900
      %v1977 = vadd.f32 %v1733, %v1903
      %v1978 = vadd.f32 %v1734, %v1905
      %v1979 = vadd.f32 %v1735, %v1908
      %v1980 = vadd.f32 %v1736, %v1910
      %v1981 = vadd.f32 %v1737, %v1913
      %v1982 = vadd.f32 %v1738, %v1915
      %v1983 = vadd.f32 %v1739, %v1918
      %v1984 = vadd.f32 %v1740, %v1920
      %v1985 = vlaneseq
      %v1986 = vshrl.u32 %v1985, 7
      %v1987 = vsub.s32 2, %v1986
      %v1988 = vrot.slane %v1113, %v1987
      %v1989 = vmul.f32 %v1077, %v1988
      %v1990 = vmul.f32 %v973, %v1988
      %v1991 = vmul.f32 %v1095, %v1988
      %v1992 = vmul.f32 %v1078, %v1988
      %v1993 = vmul.f32 %v976, %v1988
      %v1994 = vmul.f32 %v1096, %v1988
      %v1995 = vmul.f32 %v1079, %v1988
      %v1996 = vmul.f32 %v979, %v1988
      %v1997 = vmul.f32 %v1097, %v1988
      %v1998 = vmul.f32 %v1080, %v1988
      %v1999 = vmul.f32 %v982, %v1988
      %v2000 = vmul.f32 %v1098, %v1988
      %v2001 = vmul.f32 %v1081, %v1988
      %v2002 = vmul.f32 %v985, %v1988
      %v2003 = vmul.f32 %v1099, %v1988
      %v2004 = vmul.f32 %v1082, %v1988
      %v2005 = vmul.f32 %v988, %v1988
      %v2006 = vmul.f32 %v1100, %v1988
      %v2007 = vmul.f32 %v1083, %v1988
      %v2008 = vmul.f32 %v991, %v1988
      %v2009 = vmul.f32 %v1101, %v1988
      %v2010 = vmul.f32 %v1084, %v1988
      %v2011 = vmul.f32 %v994, %v1988
      %v2012 = vmul.f32 %v1102, %v1988
      %v2013 = vmul.f32 %v1085, %v1988
      %v2014 = vmul.f32 %v997, %v1988
      %v2015 = vmul.f32 %v1103, %v1988
      %v2016 = vmul.f32 %v1086, %v1988
      %v2017 = vmul.f32 %v1000, %v1988
      %v2018 = vmul.f32 %v1104, %v1988
      %v2019 = vmul.f32 %v1087, %v1988
      %v2020 = vmul.f32 %v1003, %v1988
      %v2021 = vmul.f32 %v1105, %v1988
      %v2022 = vmul.f32 %v1088, %v1988
      %v2023 = vmul.f32 %v1006, %v1988
      %v2024 = vmul.f32 %v1106, %v1988
      %v2025 = vmul.f32 %v1089, %v1988
      %v2026 = vmul.f32 %v1009, %v1988
      %v2027 = vmul.f32 %v1107, %v1988
      %v2028 = vmul.f32 %v1090, %v1988
      %v2029 = vmul.f32 %v1012, %v1988
      %v2030 = vmul.f32 %v1108, %v1988
      %v2031 = vmul.f32 %v1091, %v1988
      %v2032 = vmul.f32 %v1015, %v1988
      %v2033 = vmul.f32 %v1109, %v1988
      %v2034 = vmul.f32 %v1092, %v1988
      %v2035 = vmul.f32 %v1018, %v1988
      %v2036 = vmul.f32 %v1110, %v1988
      %v2085 = vrot.slane %v1989, 2
      %v2086 = vrot.slane %v1990, 2
      %v2087 = vsel %vm1528, %v2085, %v2086
      %v2088 = vrot.slane %v1991, 2
      %v2089 = vsel %vm1528, %v2086, %v2088
      %v2090 = vrot.slane %v1992, 2
      %v2091 = vrot.slane %v1993, 2
      %v2092 = vsel %vm1528, %v2090, %v2091
      %v2093 = vrot.slane %v1994, 2
      %v2094 = vsel %vm1528, %v2091, %v2093
      %v2095 = vrot.slane %v1995, 2
      %v2096 = vrot.slane %v1996, 2
      %v2097 = vsel %vm1528, %v2095, %v2096
      %v2098 = vrot.slane %v1997, 2
      %v2099 = vsel %vm1528, %v2096, %v2098
      %v2100 = vrot.slane %v1998, 2
      %v2101 = vrot.slane %v1999, 2
      %v2102 = vsel %vm1528, %v2100, %v2101
      %v2103 = vrot.slane %v2000, 2
      %v2104 = vsel %vm1528, %v2101, %v2103
      %v2105 = vrot.slane %v2001, 2
      %v2106 = vrot.slane %v2002, 2
      %v2107 = vsel %vm1528, %v2105, %v2106
      %v2108 = vrot.slane %v2003, 2
      %v2109 = vsel %vm1528, %v2106, %v2108
      %v2110 = vrot.slane %v2004, 2
      %v2111 = vrot.slane %v2005, 2
      %v2112 = vsel %vm1528, %v2110, %v2111
      %v2113 = vrot.slane %v2006, 2
      %v2114 = vsel %vm1528, %v2111, %v2113
      %v2115 = vrot.slane %v2007, 2
      %v2116 = vrot.slane %v2008, 2
      %v2117 = vsel %vm1528, %v2115, %v2116
      %v2118 = vrot.slane %v2009, 2
      %v2119 = vsel %vm1528, %v2116, %v2118
      %v2120 = vrot.slane %v2010, 2
      %v2121 = vrot.slane %v2011, 2
      %v2122 = vsel %vm1528, %v2120, %v2121
      %v2123 = vrot.slane %v2012, 2
      %v2124 = vsel %vm1528, %v2121, %v2123
      %v2125 = vrot.slane %v2013, 2
      %v2126 = vrot.slane %v2014, 2
      %v2127 = vsel %vm1528, %v2125, %v2126
      %v2128 = vrot.slane %v2015, 2
      %v2129 = vsel %vm1528, %v2126, %v2128
      %v2130 = vrot.slane %v2016, 2
      %v2131 = vrot.slane %v2017, 2
      %v2132 = vsel %vm1528, %v2130, %v2131
      %v2133 = vrot.slane %v2018, 2
      %v2134 = vsel %vm1528, %v2131, %v2133
      %v2135 = vrot.slane %v2019, 2
      %v2136 = vrot.slane %v2020, 2
      %v2137 = vsel %vm1528, %v2135, %v2136
      %v2138 = vrot.slane %v2021, 2
      %v2139 = vsel %vm1528, %v2136, %v2138
      %v2140 = vrot.slane %v2022, 2
      %v2141 = vrot.slane %v2023, 2
      %v2142 = vsel %vm1528, %v2140, %v2141
      %v2143 = vrot.slane %v2024, 2
      %v2144 = vsel %vm1528, %v2141, %v2143
      %v2145 = vrot.slane %v2025, 2
      %v2146 = vrot.slane %v2026, 2
      %v2147 = vsel %vm1528, %v2145, %v2146
      %v2148 = vrot.slane %v2027, 2
      %v2149 = vsel %vm1528, %v2146, %v2148
      %v2150 = vrot.slane %v2028, 2
      %v2151 = vrot.slane %v2029, 2
      %v2152 = vsel %vm1528, %v2150, %v2151
      %v2153 = vrot.slane %v2030, 2
      %v2154 = vsel %vm1528, %v2151, %v2153
      %v2155 = vrot.slane %v2031, 2
      %v2156 = vrot.slane %v2032, 2
      %v2157 = vsel %vm1528, %v2155, %v2156
      %v2158 = vrot.slane %v2033, 2
      %v2159 = vsel %vm1528, %v2156, %v2158
      %v2160 = vrot.slane %v2034, 2
      %v2161 = vrot.slane %v2035, 2
      %v2162 = vsel %vm1528, %v2160, %v2161
      %v2163 = vrot.slane %v2036, 2
      %v2164 = vsel %vm1528, %v2161, %v2163
      %v2197 = vadd.f32 %v1953, %v2087
      %v2198 = vadd.f32 %v1954, %v2089
      %v2199 = vadd.f32 %v1955, %v2092
      %v2200 = vadd.f32 %v1956, %v2094
      %v2201 = vadd.f32 %v1957, %v2097
      %v2202 = vadd.f32 %v1958, %v2099
      %v2203 = vadd.f32 %v1959, %v2102
      %v2204 = vadd.f32 %v1960, %v2104
      %v2205 = vadd.f32 %v1961, %v2107
      %v2206 = vadd.f32 %v1962, %v2109
      %v2207 = vadd.f32 %v1963, %v2112
      %v2208 = vadd.f32 %v1964, %v2114
      %v2209 = vadd.f32 %v1965, %v2117
      %v2210 = vadd.f32 %v1966, %v2119
      %v2211 = vadd.f32 %v1967, %v2122
      %v2212 = vadd.f32 %v1968, %v2124
      %v2213 = vadd.f32 %v1969, %v2127
      %v2214 = vadd.f32 %v1970, %v2129
      %v2215 = vadd.f32 %v1971, %v2132
      %v2216 = vadd.f32 %v1972, %v2134
      %v2217 = vadd.f32 %v1973, %v2137
      %v2218 = vadd.f32 %v1974, %v2139
      %v2219 = vadd.f32 %v1975, %v2142
      %v2220 = vadd.f32 %v1976, %v2144
      %v2221 = vadd.f32 %v1977, %v2147
      %v2222 = vadd.f32 %v1978, %v2149
      %v2223 = vadd.f32 %v1979, %v2152
      %v2224 = vadd.f32 %v1980, %v2154
      %v2225 = vadd.f32 %v1981, %v2157
      %v2226 = vadd.f32 %v1982, %v2159
      %v2227 = vadd.f32 %v1983, %v2162
      %v2228 = vadd.f32 %v1984, %v2164
      %v2229 = vlaneseq
      %v2230 = vshrl.u32 %v2229, 7
      %v2231 = vsub.s32 0, %v2230
      %v2232 = vrot.slane %v1114, %v2231
      %v2233 = vmul.f32 %v1078, %v2232
      %v2234 = vmul.f32 %v976, %v2232
      %v2235 = vmul.f32 %v1079, %v2232
      %v2236 = vmul.f32 %v979, %v2232
      %v2237 = vmul.f32 %v1080, %v2232
      %v2238 = vmul.f32 %v982, %v2232
      %v2239 = vmul.f32 %v1081, %v2232
      %v2240 = vmul.f32 %v985, %v2232
      %v2241 = vmul.f32 %v1082, %v2232
      %v2242 = vmul.f32 %v988, %v2232
      %v2243 = vmul.f32 %v1083, %v2232
      %v2244 = vmul.f32 %v991, %v2232
      %v2245 = vmul.f32 %v1084, %v2232
      %v2246 = vmul.f32 %v994, %v2232
      %v2247 = vmul.f32 %v1085, %v2232
      %v2248 = vmul.f32 %v997, %v2232
      %v2249 = vmul.f32 %v1086, %v2232
      %v2250 = vmul.f32 %v1000, %v2232
      %v2251 = vmul.f32 %v1087, %v2232
      %v2252 = vmul.f32 %v1003, %v2232
      %v2253 = vmul.f32 %v1088, %v2232
      %v2254 = vmul.f32 %v1006, %v2232
      %v2255 = vmul.f32 %v1089, %v2232
      %v2256 = vmul.f32 %v1009, %v2232
      %v2257 = vmul.f32 %v1090, %v2232
      %v2258 = vmul.f32 %v1012, %v2232
      %v2259 = vmul.f32 %v1091, %v2232
      %v2260 = vmul.f32 %v1015, %v2232
      %v2261 = vmul.f32 %v1092, %v2232
      %v2262 = vmul.f32 %v1018, %v2232
      %v2263 = vmul.f32 %v1093, %v2232
      %v2264 = vmul.f32 %v1021, %v2232
      %v2265 = vadd.f32 %v2197, %v2233
      %v2266 = vadd.f32 %v2198, %v2234
      %v2267 = vadd.f32 %v2199, %v2235
      %v2268 = vadd.f32 %v2200, %v2236
      %v2269 = vadd.f32 %v2201, %v2237
      %v2270 = vadd.f32 %v2202, %v2238
      %v2271 = vadd.f32 %v2203, %v2239
      %v2272 = vadd.f32 %v2204, %v2240
      %v2273 = vadd.f32 %v2205, %v2241
      %v2274 = vadd.f32 %v2206, %v2242
      %v2275 = vadd.f32 %v2207, %v2243
      %v2276 = vadd.f32 %v2208, %v2244
      %v2277 = vadd.f32 %v2209, %v2245
      %v2278 = vadd.f32 %v2210, %v2246
      %v2279 = vadd.f32 %v2211, %v2247
      %v2280 = vadd.f32 %v2212, %v2248
      %v2281 = vadd.f32 %v2213, %v2249
      %v2282 = vadd.f32 %v2214, %v2250
      %v2283 = vadd.f32 %v2215, %v2251
      %v2284 = vadd.f32 %v2216, %v2252
      %v2285 = vadd.f32 %v2217, %v2253
      %v2286 = vadd.f32 %v2218, %v2254
      %v2287 = vadd.f32 %v2219, %v2255
      %v2288 = vadd.f32 %v2220, %v2256
      %v2289 = vadd.f32 %v2221, %v2257
      %v2290 = vadd.f32 %v2222, %v2258
      %v2291 = vadd.f32 %v2223, %v2259
      %v2292 = vadd.f32 %v2224, %v2260
      %v2293 = vadd.f32 %v2225, %v2261
      %v2294 = vadd.f32 %v2226, %v2262
      %v2295 = vadd.f32 %v2227, %v2263
      %v2296 = vadd.f32 %v2228, %v2264
      %v2297 = vlaneseq
      %v2298 = vshrl.u32 %v2297, 7
      %v2299 = vsub.s32 1, %v2298
      %v2300 = vrot.slane %v1114, %v2299
      %v2301 = vmul.f32 %v1078, %v2300
      %v2302 = vmul.f32 %v976, %v2300
      %v2303 = vmul.f32 %v1096, %v2300
      %v2304 = vmul.f32 %v1079, %v2300
      %v2305 = vmul.f32 %v979, %v2300
      %v2306 = vmul.f32 %v1097, %v2300
      %v2307 = vmul.f32 %v1080, %v2300
      %v2308 = vmul.f32 %v982, %v2300
      %v2309 = vmul.f32 %v1098, %v2300
      %v2310 = vmul.f32 %v1081, %v2300
      %v2311 = vmul.f32 %v985, %v2300
      %v2312 = vmul.f32 %v1099, %v2300
      %v2313 = vmul.f32 %v1082, %v2300
      %v2314 = vmul.f32 %v988, %v2300
      %v2315 = vmul.f32 %v1100, %v2300
      %v2316 = vmul.f32 %v1083, %v2300
      %v2317 = vmul.f32 %v991, %v2300
      %v2318 = vmul.f32 %v1101, %v2300
      %v2319 = vmul.f32 %v1084, %v2300
      %v2320 = vmul.f32 %v994, %v2300
      %v2321 = vmul.f32 %v1102, %v2300
      %v2322 = vmul.f32 %v1085, %v2300
      %v2323 = vmul.f32 %v997, %v2300
      %v2324 = vmul.f32 %v1103, %v2300
      %v2325 = vmul.f32 %v1086, %v2300
      %v2326 = vmul.f32 %v1000, %v2300
      %v2327 = vmul.f32 %v1104, %v2300
      %v2328 = vmul.f32 %v1087, %v2300
      %v2329 = vmul.f32 %v1003, %v2300
      %v2330 = vmul.f32 %v1105, %v2300
      %v2331 = vmul.f32 %v1088, %v2300
      %v2332 = vmul.f32 %v1006, %v2300
      %v2333 = vmul.f32 %v1106, %v2300
      %v2334 = vmul.f32 %v1089, %v2300
      %v2335 = vmul.f32 %v1009, %v2300
      %v2336 = vmul.f32 %v1107, %v2300
      %v2337 = vmul.f32 %v1090, %v2300
      %v2338 = vmul.f32 %v1012, %v2300
      %v2339 = vmul.f32 %v1108, %v2300
      %v2340 = vmul.f32 %v1091, %v2300
      %v2341 = vmul.f32 %v1015, %v2300
      %v2342 = vmul.f32 %v1109, %v2300
      %v2343 = vmul.f32 %v1092, %v2300
      %v2344 = vmul.f32 %v1018, %v2300
      %v2345 = vmul.f32 %v1110, %v2300
      %v2346 = vmul.f32 %v1093, %v2300
      %v2347 = vmul.f32 %v1021, %v2300
      %v2348 = vmul.f32 %v1111, %v2300
      %v2397 = vrot.slane %v2301, 1
      %v2398 = vrot.slane %v2302, 1
      %v2399 = vsel %vm1283, %v2397, %v2398
      %v2400 = vrot.slane %v2303, 1
      %v2401 = vsel %vm1283, %v2398, %v2400
      %v2402 = vrot.slane %v2304, 1
      %v2403 = vrot.slane %v2305, 1
      %v2404 = vsel %vm1283, %v2402, %v2403
      %v2405 = vrot.slane %v2306, 1
      %v2406 = vsel %vm1283, %v2403, %v2405
      %v2407 = vrot.slane %v2307, 1
      %v2408 = vrot.slane %v2308, 1
      %v2409 = vsel %vm1283, %v2407, %v2408
      %v2410 = vrot.slane %v2309, 1
      %v2411 = vsel %vm1283, %v2408, %v2410
      %v2412 = vrot.slane %v2310, 1
      %v2413 = vrot.slane %v2311, 1
      %v2414 = vsel %vm1283, %v2412, %v2413
      %v2415 = vrot.slane %v2312, 1
      %v2416 = vsel %vm1283, %v2413, %v2415
      %v2417 = vrot.slane %v2313, 1
      %v2418 = vrot.slane %v2314, 1
      %v2419 = vsel %vm1283, %v2417, %v2418
      %v2420 = vrot.slane %v2315, 1
      %v2421 = vsel %vm1283, %v2418, %v2420
      %v2422 = vrot.slane %v2316, 1
      %v2423 = vrot.slane %v2317, 1
      %v2424 = vsel %vm1283, %v2422, %v2423
      %v2425 = vrot.slane %v2318, 1
      %v2426 = vsel %vm1283, %v2423, %v2425
      %v2427 = vrot.slane %v2319, 1
      %v2428 = vrot.slane %v2320, 1
      %v2429 = vsel %vm1283, %v2427, %v2428
      %v2430 = vrot.slane %v2321, 1
      %v2431 = vsel %vm1283, %v2428, %v2430
      %v2432 = vrot.slane %v2322, 1
      %v2433 = vrot.slane %v2323, 1
      %v2434 = vsel %vm1283, %v2432, %v2433
      %v2435 = vrot.slane %v2324, 1
      %v2436 = vsel %vm1283, %v2433, %v2435
      %v2437 = vrot.slane %v2325, 1
      %v2438 = vrot.slane %v2326, 1
      %v2439 = vsel %vm1283, %v2437, %v2438
      %v2440 = vrot.slane %v2327, 1
      %v2441 = vsel %vm1283, %v2438, %v2440
      %v2442 = vrot.slane %v2328, 1
      %v2443 = vrot.slane %v2329, 1
      %v2444 = vsel %vm1283, %v2442, %v2443
      %v2445 = vrot.slane %v2330, 1
      %v2446 = vsel %vm1283, %v2443, %v2445
      %v2447 = vrot.slane %v2331, 1
      %v2448 = vrot.slane %v2332, 1
      %v2449 = vsel %vm1283, %v2447, %v2448
      %v2450 = vrot.slane %v2333, 1
      %v2451 = vsel %vm1283, %v2448, %v2450
      %v2452 = vrot.slane %v2334, 1
      %v2453 = vrot.slane %v2335, 1
      %v2454 = vsel %vm1283, %v2452, %v2453
      %v2455 = vrot.slane %v2336, 1
      %v2456 = vsel %vm1283, %v2453, %v2455
      %v2457 = vrot.slane %v2337, 1
      %v2458 = vrot.slane %v2338, 1
      %v2459 = vsel %vm1283, %v2457, %v2458
      %v2460 = vrot.slane %v2339, 1
      %v2461 = vsel %vm1283, %v2458, %v2460
      %v2462 = vrot.slane %v2340, 1
      %v2463 = vrot.slane %v2341, 1
      %v2464 = vsel %vm1283, %v2462, %v2463
      %v2465 = vrot.slane %v2342, 1
      %v2466 = vsel %vm1283, %v2463, %v2465
      %v2467 = vrot.slane %v2343, 1
      %v2468 = vrot.slane %v2344, 1
      %v2469 = vsel %vm1283, %v2467, %v2468
      %v2470 = vrot.slane %v2345, 1
      %v2471 = vsel %vm1283, %v2468, %v2470
      %v2472 = vrot.slane %v2346, 1
      %v2473 = vrot.slane %v2347, 1
      %v2474 = vsel %vm1283, %v2472, %v2473
      %v2475 = vrot.slane %v2348, 1
      %v2476 = vsel %vm1283, %v2473, %v2475
      %v2509 = vadd.f32 %v2265, %v2399
      %v2510 = vadd.f32 %v2266, %v2401
      %v2511 = vadd.f32 %v2267, %v2404
      %v2512 = vadd.f32 %v2268, %v2406
      %v2513 = vadd.f32 %v2269, %v2409
      %v2514 = vadd.f32 %v2270, %v2411
      %v2515 = vadd.f32 %v2271, %v2414
      %v2516 = vadd.f32 %v2272, %v2416
      %v2517 = vadd.f32 %v2273, %v2419
      %v2518 = vadd.f32 %v2274, %v2421
      %v2519 = vadd.f32 %v2275, %v2424
      %v2520 = vadd.f32 %v2276, %v2426
      %v2521 = vadd.f32 %v2277, %v2429
      %v2522 = vadd.f32 %v2278, %v2431
      %v2523 = vadd.f32 %v2279, %v2434
      %v2524 = vadd.f32 %v2280, %v2436
      %v2525 = vadd.f32 %v2281, %v2439
      %v2526 = vadd.f32 %v2282, %v2441
      %v2527 = vadd.f32 %v2283, %v2444
      %v2528 = vadd.f32 %v2284, %v2446
      %v2529 = vadd.f32 %v2285, %v2449
      %v2530 = vadd.f32 %v2286, %v2451
      %v2531 = vadd.f32 %v2287, %v2454
      %v2532 = vadd.f32 %v2288, %v2456
      %v2533 = vadd.f32 %v2289, %v2459
      %v2534 = vadd.f32 %v2290, %v2461
      %v2535 = vadd.f32 %v2291, %v2464
      %v2536 = vadd.f32 %v2292, %v2466
      %v2537 = vadd.f32 %v2293, %v2469
      %v2538 = vadd.f32 %v2294, %v2471
      %v2539 = vadd.f32 %v2295, %v2474
      %v2540 = vadd.f32 %v2296, %v2476
      %v2541 = vlaneseq
      %v2542 = vshrl.u32 %v2541, 7
      %v2543 = vsub.s32 2, %v2542
      %v2544 = vrot.slane %v1114, %v2543
      %v2545 = vmul.f32 %v1078, %v2544
      %v2546 = vmul.f32 %v976, %v2544
      %v2547 = vmul.f32 %v1096, %v2544
      %v2548 = vmul.f32 %v1079, %v2544
      %v2549 = vmul.f32 %v979, %v2544
      %v2550 = vmul.f32 %v1097, %v2544
      %v2551 = vmul.f32 %v1080, %v2544
      %v2552 = vmul.f32 %v982, %v2544
      %v2553 = vmul.f32 %v1098, %v2544
      %v2554 = vmul.f32 %v1081, %v2544
      %v2555 = vmul.f32 %v985, %v2544
      %v2556 = vmul.f32 %v1099, %v2544
      %v2557 = vmul.f32 %v1082, %v2544
      %v2558 = vmul.f32 %v988, %v2544
      %v2559 = vmul.f32 %v1100, %v2544
      %v2560 = vmul.f32 %v1083, %v2544
      %v2561 = vmul.f32 %v991, %v2544
      %v2562 = vmul.f32 %v1101, %v2544
      %v2563 = vmul.f32 %v1084, %v2544
      %v2564 = vmul.f32 %v994, %v2544
      %v2565 = vmul.f32 %v1102, %v2544
      %v2566 = vmul.f32 %v1085, %v2544
      %v2567 = vmul.f32 %v997, %v2544
      %v2568 = vmul.f32 %v1103, %v2544
      %v2569 = vmul.f32 %v1086, %v2544
      %v2570 = vmul.f32 %v1000, %v2544
      %v2571 = vmul.f32 %v1104, %v2544
      %v2572 = vmul.f32 %v1087, %v2544
      %v2573 = vmul.f32 %v1003, %v2544
      %v2574 = vmul.f32 %v1105, %v2544
      %v2575 = vmul.f32 %v1088, %v2544
      %v2576 = vmul.f32 %v1006, %v2544
      %v2577 = vmul.f32 %v1106, %v2544
      %v2578 = vmul.f32 %v1089, %v2544
      %v2579 = vmul.f32 %v1009, %v2544
      %v2580 = vmul.f32 %v1107, %v2544
      %v2581 = vmul.f32 %v1090, %v2544
      %v2582 = vmul.f32 %v1012, %v2544
      %v2583 = vmul.f32 %v1108, %v2544
      %v2584 = vmul.f32 %v1091, %v2544
      %v2585 = vmul.f32 %v1015, %v2544
      %v2586 = vmul.f32 %v1109, %v2544
      %v2587 = vmul.f32 %v1092, %v2544
      %v2588 = vmul.f32 %v1018, %v2544
      %v2589 = vmul.f32 %v1110, %v2544
      %v2590 = vmul.f32 %v1093, %v2544
      %v2591 = vmul.f32 %v1021, %v2544
      %v2592 = vmul.f32 %v1111, %v2544
      %v2641 = vrot.slane %v2545, 2
      %v2642 = vrot.slane %v2546, 2
      %v2643 = vsel %vm1528, %v2641, %v2642
      %v2644 = vrot.slane %v2547, 2
      %v2645 = vsel %vm1528, %v2642, %v2644
      %v2646 = vrot.slane %v2548, 2
      %v2647 = vrot.slane %v2549, 2
      %v2648 = vsel %vm1528, %v2646, %v2647
      %v2649 = vrot.slane %v2550, 2
      %v2650 = vsel %vm1528, %v2647, %v2649
      %v2651 = vrot.slane %v2551, 2
      %v2652 = vrot.slane %v2552, 2
      %v2653 = vsel %vm1528, %v2651, %v2652
      %v2654 = vrot.slane %v2553, 2
      %v2655 = vsel %vm1528, %v2652, %v2654
      %v2656 = vrot.slane %v2554, 2
      %v2657 = vrot.slane %v2555, 2
      %v2658 = vsel %vm1528, %v2656, %v2657
      %v2659 = vrot.slane %v2556, 2
      %v2660 = vsel %vm1528, %v2657, %v2659
      %v2661 = vrot.slane %v2557, 2
      %v2662 = vrot.slane %v2558, 2
      %v2663 = vsel %vm1528, %v2661, %v2662
      %v2664 = vrot.slane %v2559, 2
      %v2665 = vsel %vm1528, %v2662, %v2664
      %v2666 = vrot.slane %v2560, 2
      %v2667 = vrot.slane %v2561, 2
      %v2668 = vsel %vm1528, %v2666, %v2667
      %v2669 = vrot.slane %v2562, 2
      %v2670 = vsel %vm1528, %v2667, %v2669
      %v2671 = vrot.slane %v2563, 2
      %v2672 = vrot.slane %v2564, 2
      %v2673 = vsel %vm1528, %v2671, %v2672
      %v2674 = vrot.slane %v2565, 2
      %v2675 = vsel %vm1528, %v2672, %v2674
      %v2676 = vrot.slane %v2566, 2
      %v2677 = vrot.slane %v2567, 2
      %v2678 = vsel %vm1528, %v2676, %v2677
      %v2679 = vrot.slane %v2568, 2
      %v2680 = vsel %vm1528, %v2677, %v2679
      %v2681 = vrot.slane %v2569, 2
      %v2682 = vrot.slane %v2570, 2
      %v2683 = vsel %vm1528, %v2681, %v2682
      %v2684 = vrot.slane %v2571, 2
      %v2685 = vsel %vm1528, %v2682, %v2684
      %v2686 = vrot.slane %v2572, 2
      %v2687 = vrot.slane %v2573, 2
      %v2688 = vsel %vm1528, %v2686, %v2687
      %v2689 = vrot.slane %v2574, 2
      %v2690 = vsel %vm1528, %v2687, %v2689
      %v2691 = vrot.slane %v2575, 2
      %v2692 = vrot.slane %v2576, 2
      %v2693 = vsel %vm1528, %v2691, %v2692
      %v2694 = vrot.slane %v2577, 2
      %v2695 = vsel %vm1528, %v2692, %v2694
      %v2696 = vrot.slane %v2578, 2
      %v2697 = vrot.slane %v2579, 2
      %v2698 = vsel %vm1528, %v2696, %v2697
      %v2699 = vrot.slane %v2580, 2
      %v2700 = vsel %vm1528, %v2697, %v2699
      %v2701 = vrot.slane %v2581, 2
      %v2702 = vrot.slane %v2582, 2
      %v2703 = vsel %vm1528, %v2701, %v2702
      %v2704 = vrot.slane %v2583, 2
      %v2705 = vsel %vm1528, %v2702, %v2704
      %v2706 = vrot.slane %v2584, 2
      %v2707 = vrot.slane %v2585, 2
      %v2708 = vsel %vm1528, %v2706, %v2707
      %v2709 = vrot.slane %v2586, 2
      %v2710 = vsel %vm1528, %v2707, %v2709
      %v2711 = vrot.slane %v2587, 2
      %v2712 = vrot.slane %v2588, 2
      %v2713 = vsel %vm1528, %v2711, %v2712
      %v2714 = vrot.slane %v2589, 2
      %v2715 = vsel %vm1528, %v2712, %v2714
      %v2716 = vrot.slane %v2590, 2
      %v2717 = vrot.slane %v2591, 2
      %v2718 = vsel %vm1528, %v2716, %v2717
      %v2719 = vrot.slane %v2592, 2
      %v2720 = vsel %vm1528, %v2717, %v2719
      %v2753 = vadd.f32 %v2509, %v2643
      %v2754 = vadd.f32 %v2510, %v2645
      %v2755 = vadd.f32 %v2511, %v2648
      %v2756 = vadd.f32 %v2512, %v2650
      %v2757 = vadd.f32 %v2513, %v2653
      %v2758 = vadd.f32 %v2514, %v2655
      %v2759 = vadd.f32 %v2515, %v2658
      %v2760 = vadd.f32 %v2516, %v2660
      %v2761 = vadd.f32 %v2517, %v2663
      %v2762 = vadd.f32 %v2518, %v2665
      %v2763 = vadd.f32 %v2519, %v2668
      %v2764 = vadd.f32 %v2520, %v2670
      %v2765 = vadd.f32 %v2521, %v2673
      %v2766 = vadd.f32 %v2522, %v2675
      %v2767 = vadd.f32 %v2523, %v2678
      %v2768 = vadd.f32 %v2524, %v2680
      %v2769 = vadd.f32 %v2525, %v2683
      %v2770 = vadd.f32 %v2526, %v2685
      %v2771 = vadd.f32 %v2527, %v2688
      %v2772 = vadd.f32 %v2528, %v2690
      %v2773 = vadd.f32 %v2529, %v2693
      %v2774 = vadd.f32 %v2530, %v2695
      %v2775 = vadd.f32 %v2531, %v2698
      %v2776 = vadd.f32 %v2532, %v2700
      %v2777 = vadd.f32 %v2533, %v2703
      %v2778 = vadd.f32 %v2534, %v2705
      %v2779 = vadd.f32 %v2535, %v2708
      %v2780 = vadd.f32 %v2536, %v2710
      %v2781 = vadd.f32 %v2537, %v2713
      %v2782 = vadd.f32 %v2538, %v2715
      %v2783 = vadd.f32 %v2539, %v2718
      %v2784 = vadd.f32 %v2540, %v2720
      %v2785 = vld [vmem:[%s6] sm:$0x1]
      %v2787 = vlaneseq
      %v2788 = vshrl.u32 %v2787, 7
      %v2789 = vsub.s32 0, %v2788
      %v2790 = vrot.slane %v2785, %v2789
      %v2792 = vadd.f32 %v2753, %v2790
      %v2793 = vadd.f32 %v2754, %v2790
      %v2794 = vadd.f32 %v2755, %v2790
      %v2795 = vadd.f32 %v2756, %v2790
      %v2796 = vadd.f32 %v2757, %v2790
      %v2797 = vadd.f32 %v2758, %v2790
      %v2798 = vadd.f32 %v2759, %v2790
      %v2799 = vadd.f32 %v2760, %v2790
      %v2800 = vadd.f32 %v2761, %v2790
      %v2801 = vadd.f32 %v2762, %v2790
      %v2802 = vadd.f32 %v2763, %v2790
      %v2803 = vadd.f32 %v2764, %v2790
      %v2804 = vadd.f32 %v2765, %v2790
      %v2805 = vadd.f32 %v2766, %v2790
      %v2806 = vadd.f32 %v2767, %v2790
      %v2807 = vadd.f32 %v2768, %v2790
      %v2808 = vadd.f32 %v2769, %v2790
      %v2809 = vadd.f32 %v2770, %v2790
      %v2810 = vadd.f32 %v2771, %v2790
      %v2811 = vadd.f32 %v2772, %v2790
      %v2812 = vadd.f32 %v2773, %v2790
      %v2813 = vadd.f32 %v2774, %v2790
      %v2814 = vadd.f32 %v2775, %v2790
      %v2815 = vadd.f32 %v2776, %v2790
      %v2816 = vadd.f32 %v2777, %v2790
      %v2817 = vadd.f32 %v2778, %v2790
      %v2818 = vadd.f32 %v2779, %v2790
      %v2819 = vadd.f32 %v2780, %v2790
      %v2820 = vadd.f32 %v2781, %v2790
      %v2821 = vadd.f32 %v2782, %v2790
      %v2822 = vadd.f32 %v2783, %v2790
      %v2823 = vadd.f32 %v2784, %v2790
      %v2824 = vmax.f32 %v2792, 0.0
      %v2825 = vmax.f32 %v2793, 0.0
      %v2826 = vmax.f32 %v2794, 0.0
      %v2827 = vmax.f32 %v2795, 0.0
      %v2828 = vmax.f32 %v2796, 0.0
      %v2829 = vmax.f32 %v2797, 0.0
      %v2830 = vmax.f32 %v2798, 0.0
      %v2831 = vmax.f32 %v2799, 0.0
      %v2832 = vmax.f32 %v2800, 0.0
      %v2833 = vmax.f32 %v2801, 0.0
      %v2834 = vmax.f32 %v2802, 0.0
      %v2835 = vmax.f32 %v2803, 0.0
      %v2836 = vmax.f32 %v2804, 0.0
      %v2837 = vmax.f32 %v2805, 0.0
      %v2838 = vmax.f32 %v2806, 0.0
      %v2839 = vmax.f32 %v2807, 0.0
      %v2840 = vmax.f32 %v2808, 0.0
      %v2841 = vmax.f32 %v2809, 0.0
      %v2842 = vmax.f32 %v2810, 0.0
      %v2843 = vmax.f32 %v2811, 0.0
      %v2844 = vmax.f32 %v2812, 0.0
      %v2845 = vmax.f32 %v2813, 0.0
      %v2846 = vmax.f32 %v2814, 0.0
      %v2847 = vmax.f32 %v2815, 0.0
      %v2848 = vmax.f32 %v2816, 0.0
      %v2849 = vmax.f32 %v2817, 0.0
      %v2850 = vmax.f32 %v2818, 0.0
      %v2851 = vmax.f32 %v2819, 0.0
      %v2852 = vmax.f32 %v2820, 0.0
      %v2853 = vmax.f32 %v2821, 0.0
      %v2854 = vmax.f32 %v2822, 0.0
      %v2855 = vmax.f32 %v2823, 0.0
      %2888 = vrot.lane.b32.xlu0 %v2824, 4
      %v2889 = vpop.permute.xlu0 %2888
      %2890 = vrot.lane.b32.xlu0 %v2825, 4
      %v2891 = vpop.permute.xlu0 %2890
      %2892 = vrot.lane.b32.xlu0 %v2826, 4
      %v2893 = vpop.permute.xlu0 %2892
      %2894 = vrot.lane.b32.xlu0 %v2827, 4
      %v2895 = vpop.permute.xlu0 %2894
      %2896 = vrot.lane.b32.xlu0 %v2828, 4
      %v2897 = vpop.permute.xlu0 %2896
      %2898 = vrot.lane.b32.xlu0 %v2829, 4
      %v2899 = vpop.permute.xlu0 %2898
      %2900 = vrot.lane.b32.xlu0 %v2830, 4
      %v2901 = vpop.permute.xlu0 %2900
      %2902 = vrot.lane.b32.xlu0 %v2831, 4
      %v2903 = vpop.permute.xlu0 %2902
      %2904 = vrot.lane.b32.xlu0 %v2832, 4
      %v2905 = vpop.permute.xlu0 %2904
      %2906 = vrot.lane.b32.xlu0 %v2833, 4
      %v2907 = vpop.permute.xlu0 %2906
      %2908 = vrot.lane.b32.xlu0 %v2834, 4
      %v2909 = vpop.permute.xlu0 %2908
      %2910 = vrot.lane.b32.xlu0 %v2835, 4
      %v2911 = vpop.permute.xlu0 %2910
      %2912 = vrot.lane.b32.xlu0 %v2836, 4
      %v2913 = vpop.permute.xlu0 %2912
      %2914 = vrot.lane.b32.xlu0 %v2837, 4
      %v2915 = vpop.permute.xlu0 %2914
      %2916 = vrot.lane.b32.xlu0 %v2838, 4
      %v2917 = vpop.permute.xlu0 %2916
      %2918 = vrot.lane.b32.xlu0 %v2839, 4
      %v2919 = vpop.permute.xlu0 %2918
      %2920 = vrot.lane.b32.xlu0 %v2840, 4
      %v2921 = vpop.permute.xlu0 %2920
      %2922 = vrot.lane.b32.xlu0 %v2841, 4
      %v2923 = vpop.permute.xlu0 %2922
      %2924 = vrot.lane.b32.xlu0 %v2842, 4
      %v2925 = vpop.permute.xlu0 %2924
      %2926 = vrot.lane.b32.xlu0 %v2843, 4
      %v2927 = vpop.permute.xlu0 %2926
      %2928 = vrot.lane.b32.xlu0 %v2844, 4
      %v2929 = vpop.permute.xlu0 %2928
      %2930 = vrot.lane.b32.xlu0 %v2845, 4
      %v2931 = vpop.permute.xlu0 %2930
      %2932 = vrot.lane.b32.xlu0 %v2846, 4
      %v2933 = vpop.permute.xlu0 %2932
      %2934 = vrot.lane.b32.xlu0 %v2847, 4
      %v2935 = vpop.permute.xlu0 %2934
      %2936 = vrot.lane.b32.xlu0 %v2848, 4
      %v2937 = vpop.permute.xlu0 %2936
      %2938 = vrot.lane.b32.xlu0 %v2849, 4
      %v2939 = vpop.permute.xlu0 %2938
      %2940 = vrot.lane.b32.xlu0 %v2850, 4
      %v2941 = vpop.permute.xlu0 %2940
      %2942 = vrot.lane.b32.xlu0 %v2851, 4
      %v2943 = vpop.permute.xlu0 %2942
      %2944 = vrot.lane.b32.xlu0 %v2852, 4
      %v2945 = vpop.permute.xlu0 %2944
      %2946 = vrot.lane.b32.xlu0 %v2853, 4
      %v2947 = vpop.permute.xlu0 %2946
      %2948 = vrot.lane.b32.xlu0 %v2854, 4
      %v2949 = vpop.permute.xlu0 %2948
      %2950 = vrot.lane.b32.xlu0 %v2855, 4
      %v2951 = vpop.permute.xlu0 %2950
      %vm2984 = vcmask 64544
      %2985 = vst.msk [vmem:[%s445] sm:$0xff] %vm2984, %v2889
      %2986 = vst.msk [vmem:[%s445 + $0x8] sm:$0xff] %vm2984, %v2891
      %2987 = vst.msk [vmem:[%s445 + $0x10] sm:$0xff] %vm2984, %v2893
      %2988 = vst.msk [vmem:[%s445 + $0x18] sm:$0xff] %vm2984, %v2895
      %2989 = vst.msk [vmem:[%s445 + $0x20] sm:$0xff] %vm2984, %v2897
      %2990 = vst.msk [vmem:[%s445 + $0x28] sm:$0xff] %vm2984, %v2899
      %2991 = vst.msk [vmem:[%s445 + $0x30] sm:$0xff] %vm2984, %v2901
      %2992 = vst.msk [vmem:[%s445 + $0x38] sm:$0xff] %vm2984, %v2903
      %2993 = vst.msk [vmem:[%s445 + $0x40] sm:$0xff] %vm2984, %v2905
      %2994 = vst.msk [vmem:[%s445 + $0x48] sm:$0xff] %vm2984, %v2907
      %2995 = vst.msk [vmem:[%s445 + $0x50] sm:$0xff] %vm2984, %v2909
      %2996 = vst.msk [vmem:[%s445 + $0x58] sm:$0xff] %vm2984, %v2911
      %2997 = vst.msk [vmem:[%s445 + $0x60] sm:$0xff] %vm2984, %v2913
      %2998 = vst.msk [vmem:[%s445 + $0x68] sm:$0xff] %vm2984, %v2915
      %2999 = vst.msk [vmem:[%s445 + $0x70] sm:$0xff] %vm2984, %v2917
      %3000 = vst.msk [vmem:[%s445 + $0x78] sm:$0xff] %vm2984, %v2919
      %3001 = vst.msk [vmem:[%s445 + $0x80] sm:$0xff] %vm2984, %v2921
      %3002 = vst.msk [vmem:[%s445 + $0x88] sm:$0xff] %vm2984, %v2923
      %3003 = vst.msk [vmem:[%s445 + $0x90] sm:$0xff] %vm2984, %v2925
      %3004 = vst.msk [vmem:[%s445 + $0x98] sm:$0xff] %vm2984, %v2927
      %3005 = vst.msk [vmem:[%s445 + $0xa0] sm:$0xff] %vm2984, %v2929
      %3006 = vst.msk [vmem:[%s445 + $0xa8] sm:$0xff] %vm2984, %v2931
      %3007 = vst.msk [vmem:[%s445 + $0xb0] sm:$0xff] %vm2984, %v2933
      %3008 = vst.msk [vmem:[%s445 + $0xb8] sm:$0xff] %vm2984, %v2935
      %3009 = vst.msk [vmem:[%s445 + $0xc0] sm:$0xff] %vm2984, %v2937
      %3010 = vst.msk [vmem:[%s445 + $0xc8] sm:$0xff] %vm2984, %v2939
      %3011 = vst.msk [vmem:[%s445 + $0xd0] sm:$0xff] %vm2984, %v2941
      %3012 = vst.msk [vmem:[%s445 + $0xd8] sm:$0xff] %vm2984, %v2943
      %3013 = vst.msk [vmem:[%s445 + $0xe0] sm:$0xff] %vm2984, %v2945
      %3014 = vst.msk [vmem:[%s445 + $0xe8] sm:$0xff] %vm2984, %v2947
      %3015 = vst.msk [vmem:[%s445 + $0xf0] sm:$0xff] %vm2984, %v2949
      %3016 = vst.msk [vmem:[%s445 + $0xf8] sm:$0xff] %vm2984, %v2951
      %s3017 = smul.u32 16, %s23
      %p3018 = scmp.lt.s32.totalorder %s22, 1
      %s3019 = scalar_select %p3018, %s22, 1
      %p3020 = scmp.lt.s32.totalorder %s3017, 15
      %s3021 = scalar_select %p3020, %s3017, 15
      %s3022 = smul.addr %s3021, 2
      %s3023 = smul.addr %s3019, 32
      %s3024 = sadd.s32 %s3022, %s3023
      %s3025 = smul.addr %s3024, 8
      %s3026 = scalar_lea.vmem %s7, %s3025
      // Predicated region
      $region49: #{tpu_custom_call.1} parent=47 // pred_check
        %p3027 = pneg %p234
      $region50: #{tpu_custom_call.1} parent=47 // pred_check_branch
        %3029 = sbr.rel (%p3027) target = $region52
      $region51: #{tpu_custom_call.1} parent=47 // pred_region
        %s3030 = smul.u32 16, %s23
      $region52: #{tpu_custom_call.1} parent=47 // pred_fallthru
        _
    $region48: #{tpu_custom_call.1} parent=5 // pred_fallthru
      _
    %p3031 = scmp.le.s32.totalorder 2, %s13
    // Predicated region
    $region53: #{tpu_custom_call.1} parent=5 // pred_check
      %p3032 = pneg %p3031
    $region54: #{tpu_custom_call.1} parent=5 // pred_check_branch
      %3034 = sbr.rel (%p3032) target = $region56
    $region55: #{tpu_custom_call.1} parent=5 // pred_region
      %s3035 = ssub.s32 %s13, 2
      // Predicated region
      $region57: #{tpu_custom_call.1} parent=55 // pred_check
        %p3036 = pneg %p240
      $region58: #{tpu_custom_call.1} parent=55 // pred_check_branch
        %3038 = sbr.rel (%p3036) target = $region60
      $region59: #{tpu_custom_call.1} parent=55 // pred_region
        %s3039 = smul.u32 16, %s25
        %p3040 = scmp.lt.s32.totalorder %s24, 1
        %s3041 = scalar_select %p3040, %s24, 1
        %p3042 = scmp.lt.s32.totalorder %s3039, 15
        %s3043 = scalar_select %p3042, %s3039, 15
        %s3044 = smul.addr %s3043, 2
        %s3045 = smul.addr %s3041, 32
        %s3046 = sadd.s32 %s3044, %s3045
        %s3047 = smul.addr %s3046, 8
        %s3048 = scalar_lea.vmem %s7, %s3047
      $region60: #{tpu_custom_call.1} parent=55 // pred_fallthru
        _
    $region56: #{tpu_custom_call.1} parent=5 // pred_fallthru
      _
  $region6: #{tpu_custom_call.1} parent=0 // loop_footer
    %s17 = sadd.s32 1, %s13
  $region7: #{tpu_custom_call.1} parent=0 // loop_footer_branch
    %12 = sbr.rel target = $region3
  $region8: #{tpu_custom_call.1} parent=0 // loop_exit
    _

</llo_original>
